<compile_context>
chip_gen: v7x
topology: tpu7x:2x2x1
jax: 0.10.0
libtpu: 0.0.40
codegen_flags: <defaults>
</compile_context>

<pallas_src>
import functools

import jax
import jax.numpy as jnp
from jax.experimental import pallas as pl
from jax.experimental.pallas import tpu as pltpu


def _fused_double_conv3x3_relu_kernel(x_ref, w1_ref, w2_ref, o_ref, *, H, W):
    """One batch element: conv3x3+ReLU -> conv3x3+ReLU, all in VMEM.

    x_ref : (1, Cin, H*W)   channels-first, spatially flattened input
    w1_ref: (9, E, Cin)     per-tap transposed weights, tap = ky*3 + kx
    w2_ref: (9, E, E)
    o_ref : (1, H*W, E)     final (seq, channel) output block
    """
    HW = H * W

    # Flattened spatial coordinates, used to zero the taps that would read
    # outside the image (replaces explicit zero padding).
    pos = jax.lax.broadcasted_iota(jnp.int32, (1, HW), 1)
    if (W & (W - 1)) == 0:            # power-of-two width -> cheap bit ops
        xx = jnp.bitwise_and(pos, W - 1)
    else:
        xx = jnp.remainder(pos, W)

    def tap_mask(dy, dx):
        conds = []
        if dy == -1:
            conds.append(pos >= W)                # y + dy >= 0
        elif dy == 1:
            conds.append(pos < (H - 1) * W)       # y + dy <= H - 1
        if dx == -1:
            conds.append(xx >= 1)                 # x + dx >= 0
        elif dx == 1:
            conds.append(xx <= W - 2)             # x + dx <= W - 1
        if not conds:
            return None
        m = conds[0]
        for c in conds[1:]:
            m = jnp.logical_and(m, c)
        return m

    offsets = [(ky - 1, kx - 1) for ky in range(3) for kx in range(3)]
    masks = [tap_mask(dy, dx) for dy, dx in offsets]   # hoisted, reused by both convs

    def conv3x3(inp, w_ref):
        # inp: (C, HW) f32 -> returns (E, HW) f32 (pure accumulate chain).
        acc = None
        for tap, (dy, dx) in enumerate(offsets):
            off = dy * W + dx
            if off == 0:
                shifted = inp
            else:
                # shifted[p] = inp[p + off] (wraparound is zeroed by the mask)
                shifted = pltpu.roll(inp, shift=(-off) % HW, axis=1)
            if masks[tap] is not None:
                shifted = jnp.where(masks[tap], shifted, 0.0)
            contrib = jnp.dot(w_ref[tap], shifted,
                              preferred_element_type=jnp.float32)
            acc = contrib if acc is None else acc + contrib
        return acc

    x = x_ref[0].astype(jnp.float32)                  # (Cin, HW)
    h1 = jnp.maximum(conv3x3(x, w1_ref), 0.0)         # (E, HW), stays on-chip
    h2 = jnp.maximum(conv3x3(h1, w2_ref), 0.0)        # (E, HW)
    # Single on-chip transpose to the module's (H*W, E) output layout.
    o_ref[0] = jnp.transpose(h2).astype(o_ref.dtype)


@jax.jit
def conv_module_forward(x_nchw, w1_hwio, w2_hwio):
    """Forward of the PyTorch `conv` module.

    x_nchw : (B, input_dim, H, W)         (PyTorch NCHW convention)
    w*_hwio: (3, 3, Cin, Cout)            HWIO conv weights
    returns: (B, H*W, embed_dim)          == x.flatten(2).transpose(1, 2)
    """
    B, Cin, H, W = x_nchw.shape
    E = w1_hwio.shape[-1]
    HW = H * W

    # NCHW is already channels-first; flattening H*W is a free reshape.
    x_flat = x_nchw.reshape(B, Cin, HW)
    # Per-tap transposed weights (tap = ky*3+kx, shape (Cout, Cin)) so the
    # kernel does lane-dense (E, HW) = (E, Cin) @ (Cin, HW) MXU matmuls.
    w1_t = jnp.transpose(w1_hwio, (0, 1, 3, 2)).reshape(9, E, Cin)
    w2_t = jnp.transpose(w2_hwio, (0, 1, 3, 2)).reshape(9, E, E)

    kernel = functools.partial(_fused_double_conv3x3_relu_kernel, H=H, W=W)
    return pl.pallas_call(
        kernel,
        out_shape=jax.ShapeDtypeStruct((B, HW, E), x_nchw.dtype),
        grid=(B,),
        in_specs=[
            pl.BlockSpec((1, Cin, HW), lambda b: (b, 0, 0)),
            pl.BlockSpec((9, E, Cin), lambda b: (0, 0, 0)),   # weights stay resident
            pl.BlockSpec((9, E, E), lambda b: (0, 0, 0)),
        ],
        out_specs=pl.BlockSpec((1, HW, E), lambda b: (b, 0, 0)),
        compiler_params=pltpu.CompilerParams(
            dimension_semantics=("parallel",)),   # B=2 -> both v7x TensorCores
    )(x_flat, w1_t, w2_t)


def _init_conv_weight(key, cin, cout, k=3, dtype=jnp.float32):
    # Deterministic kaiming-uniform-like init (PyTorch Conv2d default scale),
    # generated directly in HWIO layout.
    fan_in = cin * k * k
    bound = 1.0 / jnp.sqrt(fan_in)
    return jax.random.uniform(key, (k, k, cin, cout), dtype,
                              minval=-bound, maxval=bound)


if __name__ == "__main__":
    # Small shapes consistent with the module: input_dim=4, embed_dim=32.
    B, Cin, H, W = 2, 4, 16, 16
    embed_dim = 32

    key = jax.random.PRNGKey(0)
    kx_, k1, k2 = jax.random.split(key, 3)

    x = jax.random.normal(kx_, (B, Cin, H, W), jnp.float32)     # NCHW input
    w1 = _init_conv_weight(k1, Cin, embed_dim)                  # (3,3,Cin,E)
    w2 = _init_conv_weight(k2, embed_dim, embed_dim)            # (3,3,E,E)

    out = conv_module_forward(x, w1, w2)
    out = jax.block_until_ready(out)
    assert out.shape == (B, H * W, embed_dim), out.shape

    # Cross-check against XLA's native conv (same semantics as PyTorch conv).
    def ref_forward(x_nchw, w1_hwio, w2_hwio):
        dn = ("NCHW", "HWIO", "NCHW")
        h = jax.lax.conv_general_dilated(x_nchw, w1_hwio, (1, 1), "SAME",
                                         dimension_numbers=dn)
        h = jnp.maximum(h, 0.0)
        h = jax.lax.conv_general_dilated(h, w2_hwio, (1, 1), "SAME",
                                         dimension_numbers=dn)
        h = jnp.maximum(h, 0.0)
        Bc, Cc, Hc, Wc = h.shape
        return jnp.transpose(h.reshape(Bc, Cc, Hc * Wc), (0, 2, 1))

    ref = jax.block_until_ready(ref_forward(x, w1, w2))
    err = float(jnp.max(jnp.abs(out - ref)))
    assert jnp.allclose(out, ref, atol=1e-4, rtol=1e-4), err

    print("KERNEL_OK")
</pallas_src>

<mosaic_0001>
module attributes {stable_mosaic.version = 11 : i64} {
  func.func @_fused_double_conv3x3_relu_kernel(%arg0: i32, %arg1: memref<1x4x256xf32, #tpu.memory_space<vmem>>, %arg2: memref<9x32x4xf32, #tpu.memory_space<vmem>>, %arg3: memref<9x32x32xf32, #tpu.memory_space<vmem>>, %arg4: memref<1x256x32xf32, #tpu.memory_space<vmem>>) attributes {dimension_semantics = [#tpu.dimension_semantics<parallel>], iteration_bounds = array<i64: 2>, scalar_prefetch = 0 : i64, scratch_operands = 0 : i64, tpu.core_type = #tpu.core_type<tc>, window_params = [{transform_indices = @transform_0, window_bounds = array<i64: 1, 4, 256>}, {pipeline_mode = #tpu.pipeline_mode<synchronous>, transform_indices = @transform_1, window_bounds = array<i64: 9, 32, 4>}, {pipeline_mode = #tpu.pipeline_mode<synchronous>, transform_indices = @transform_2, window_bounds = array<i64: 9, 32, 32>}, {transform_indices = @transform_3, window_bounds = array<i64: 1, 256, 32>}]} {
    %0 = tpu.iota {dimensions = array<i32: 1>} : vector<1x256xi32>
    %c15_i32 = arith.constant 15 : i32
    %1 = vector.broadcast %c15_i32 : i32 to vector<1x256xi32>
    %2 = arith.andi %0, %1 : vector<1x256xi32>
    %c16_i32 = arith.constant 16 : i32
    %3 = vector.broadcast %c16_i32 : i32 to vector<1x256xi32>
    %4 = arith.cmpi sge, %0, %3 : vector<1x256xi32>
    %c1_i32 = arith.constant 1 : i32
    %5 = vector.broadcast %c1_i32 : i32 to vector<1x256xi32>
    %6 = arith.cmpi sge, %2, %5 : vector<1x256xi32>
    %7 = arith.andi %4, %6 : vector<1x256xi1>
    %c16_i32_0 = arith.constant 16 : i32
    %8 = vector.broadcast %c16_i32_0 : i32 to vector<1x256xi32>
    %9 = arith.cmpi sge, %0, %8 : vector<1x256xi32>
    %c16_i32_1 = arith.constant 16 : i32
    %10 = vector.broadcast %c16_i32_1 : i32 to vector<1x256xi32>
    %11 = arith.cmpi sge, %0, %10 : vector<1x256xi32>
    %c14_i32 = arith.constant 14 : i32
    %12 = vector.broadcast %c14_i32 : i32 to vector<1x256xi32>
    %13 = arith.cmpi sle, %2, %12 : vector<1x256xi32>
    %14 = arith.andi %11, %13 : vector<1x256xi1>
    %c1_i32_2 = arith.constant 1 : i32
    %15 = vector.broadcast %c1_i32_2 : i32 to vector<1x256xi32>
    %16 = arith.cmpi sge, %2, %15 : vector<1x256xi32>
    %c14_i32_3 = arith.constant 14 : i32
    %17 = vector.broadcast %c14_i32_3 : i32 to vector<1x256xi32>
    %18 = arith.cmpi sle, %2, %17 : vector<1x256xi32>
    %c240_i32 = arith.constant 240 : i32
    %19 = vector.broadcast %c240_i32 : i32 to vector<1x256xi32>
    %20 = arith.cmpi slt, %0, %19 : vector<1x256xi32>
    %c1_i32_4 = arith.constant 1 : i32
    %21 = vector.broadcast %c1_i32_4 : i32 to vector<1x256xi32>
    %22 = arith.cmpi sge, %2, %21 : vector<1x256xi32>
    %23 = arith.andi %20, %22 : vector<1x256xi1>
    %c240_i32_5 = arith.constant 240 : i32
    %24 = vector.broadcast %c240_i32_5 : i32 to vector<1x256xi32>
    %25 = arith.cmpi slt, %0, %24 : vector<1x256xi32>
    %c240_i32_6 = arith.constant 240 : i32
    %26 = vector.broadcast %c240_i32_6 : i32 to vector<1x256xi32>
    %27 = arith.cmpi slt, %0, %26 : vector<1x256xi32>
    %c14_i32_7 = arith.constant 14 : i32
    %28 = vector.broadcast %c14_i32_7 : i32 to vector<1x256xi32>
    %29 = arith.cmpi sle, %2, %28 : vector<1x256xi32>
    %30 = arith.andi %27, %29 : vector<1x256xi1>
    %c0 = arith.constant 0 : index
    %c0_8 = arith.constant 0 : index
    %c0_9 = arith.constant 0 : index
    %31 = vector.load %arg1[%c0, %c0_8, %c0_9] : memref<1x4x256xf32, #tpu.memory_space<vmem>>, vector<1x4x256xf32>
    %32 = vector.shape_cast %31 : vector<1x4x256xf32> to vector<4x256xf32>
    %c17_i32 = arith.constant 17 : i32
    %33 = tpu.dynamic_rotate %32 by %c17_i32 dim 1 : vector<4x256xf32>, i32 -> vector<4x256xf32>
    %cst = arith.constant 0.000000e+00 : f32
    %34 = vector.shape_cast %7 : vector<1x256xi1> to vector<1x256xi1>
    %35 = vector.broadcast %34 : vector<1x256xi1> to vector<4x256xi1>
    %36 = vector.broadcast %cst : f32 to vector<4x256xf32>
    %37 = arith.select %35, %33, %36 : vector<4x256xi1>, vector<4x256xf32>
    %c0_10 = arith.constant 0 : index
    %c0_11 = arith.constant 0 : index
    %c0_12 = arith.constant 0 : index
    %38 = vector.load %arg2[%c0_10, %c0_11, %c0_12] : memref<9x32x4xf32, #tpu.memory_space<vmem>>, vector<1x32x4xf32>
    %39 = vector.shape_cast %38 : vector<1x32x4xf32> to vector<32x4xf32>
    %cst_13 = arith.constant dense<0.000000e+00> : vector<32x256xf32>
    %40 = tpu.matmul %39, %37, %cst_13 {dimension_numbers = #tpu.dot_dimension_numbers<[1], [0], [0], [1], [0, 0, 1, 1], [], []>} : vector<32x4xf32>, vector<4x256xf32>, vector<32x256xf32> -> vector<32x256xf32>
    %c16_i32_14 = arith.constant 16 : i32
    %41 = tpu.dynamic_rotate %32 by %c16_i32_14 dim 1 : vector<4x256xf32>, i32 -> vector<4x256xf32>
    %cst_15 = arith.constant 0.000000e+00 : f32
    %42 = vector.shape_cast %9 : vector<1x256xi1> to vector<1x256xi1>
    %43 = vector.broadcast %42 : vector<1x256xi1> to vector<4x256xi1>
    %44 = vector.broadcast %cst_15 : f32 to vector<4x256xf32>
    %45 = arith.select %43, %41, %44 : vector<4x256xi1>, vector<4x256xf32>
    %c1 = arith.constant 1 : index
    %c0_16 = arith.constant 0 : index
    %c0_17 = arith.constant 0 : index
    %46 = vector.load %arg2[%c1, %c0_16, %c0_17] : memref<9x32x4xf32, #tpu.memory_space<vmem>>, vector<1x32x4xf32>
    %47 = vector.shape_cast %46 : vector<1x32x4xf32> to vector<32x4xf32>
    %cst_18 = arith.constant dense<0.000000e+00> : vector<32x256xf32>
    %48 = tpu.matmul %47, %45, %cst_18 {dimension_numbers = #tpu.dot_dimension_numbers<[1], [0], [0], [1], [0, 0, 1, 1], [], []>} : vector<32x4xf32>, vector<4x256xf32>, vector<32x256xf32> -> vector<32x256xf32>
    %49 = arith.addf %40, %48 : vector<32x256xf32>
    %c15_i32_19 = arith.constant 15 : i32
    %50 = tpu.dynamic_rotate %32 by %c15_i32_19 dim 1 : vector<4x256xf32>, i32 -> vector<4x256xf32>
    %cst_20 = arith.constant 0.000000e+00 : f32
    %51 = vector.shape_cast %14 : vector<1x256xi1> to vector<1x256xi1>
    %52 = vector.broadcast %51 : vector<1x256xi1> to vector<4x256xi1>
    %53 = vector.broadcast %cst_20 : f32 to vector<4x256xf32>
    %54 = arith.select %52, %50, %53 : vector<4x256xi1>, vector<4x256xf32>
    %c2 = arith.constant 2 : index
    %c0_21 = arith.constant 0 : index
    %c0_22 = arith.constant 0 : index
    %55 = vector.load %arg2[%c2, %c0_21, %c0_22] : memref<9x32x4xf32, #tpu.memory_space<vmem>>, vector<1x32x4xf32>
    %56 = vector.shape_cast %55 : vector<1x32x4xf32> to vector<32x4xf32>
    %cst_23 = arith.constant dense<0.000000e+00> : vector<32x256xf32>
    %57 = tpu.matmul %56, %54, %cst_23 {dimension_numbers = #tpu.dot_dimension_numbers<[1], [0], [0], [1], [0, 0, 1, 1], [], []>} : vector<32x4xf32>, vector<4x256xf32>, vector<32x256xf32> -> vector<32x256xf32>
    %58 = arith.addf %49, %57 : vector<32x256xf32>
    %c1_i32_24 = arith.constant 1 : i32
    %59 = tpu.dynamic_rotate %32 by %c1_i32_24 dim 1 : vector<4x256xf32>, i32 -> vector<4x256xf32>
    %cst_25 = arith.constant 0.000000e+00 : f32
    %60 = vector.shape_cast %16 : vector<1x256xi1> to vector<1x256xi1>
    %61 = vector.broadcast %60 : vector<1x256xi1> to vector<4x256xi1>
    %62 = vector.broadcast %cst_25 : f32 to vector<4x256xf32>
    %63 = arith.select %61, %59, %62 : vector<4x256xi1>, vector<4x256xf32>
    %c3 = arith.constant 3 : index
    %c0_26 = arith.constant 0 : index
    %c0_27 = arith.constant 0 : index
    %64 = vector.load %arg2[%c3, %c0_26, %c0_27] : memref<9x32x4xf32, #tpu.memory_space<vmem>>, vector<1x32x4xf32>
    %65 = vector.shape_cast %64 : vector<1x32x4xf32> to vector<32x4xf32>
    %cst_28 = arith.constant dense<0.000000e+00> : vector<32x256xf32>
    %66 = tpu.matmul %65, %63, %cst_28 {dimension_numbers = #tpu.dot_dimension_numbers<[1], [0], [0], [1], [0, 0, 1, 1], [], []>} : vector<32x4xf32>, vector<4x256xf32>, vector<32x256xf32> -> vector<32x256xf32>
    %67 = arith.addf %58, %66 : vector<32x256xf32>
    %c4 = arith.constant 4 : index
    %c0_29 = arith.constant 0 : index
    %c0_30 = arith.constant 0 : index
    %68 = vector.load %arg2[%c4, %c0_29, %c0_30] : memref<9x32x4xf32, #tpu.memory_space<vmem>>, vector<1x32x4xf32>
    %69 = vector.shape_cast %68 : vector<1x32x4xf32> to vector<32x4xf32>
    %cst_31 = arith.constant dense<0.000000e+00> : vector<32x256xf32>
    %70 = tpu.matmul %69, %32, %cst_31 {dimension_numbers = #tpu.dot_dimension_numbers<[1], [0], [0], [1], [0, 0, 1, 1], [], []>} : vector<32x4xf32>, vector<4x256xf32>, vector<32x256xf32> -> vector<32x256xf32>
    %71 = arith.addf %67, %70 : vector<32x256xf32>
    %c255_i32 = arith.constant 255 : i32
    %72 = tpu.dynamic_rotate %32 by %c255_i32 dim 1 : vector<4x256xf32>, i32 -> vector<4x256xf32>
    %cst_32 = arith.constant 0.000000e+00 : f32
    %73 = vector.shape_cast %18 : vector<1x256xi1> to vector<1x256xi1>
    %74 = vector.broadcast %73 : vector<1x256xi1> to vector<4x256xi1>
    %75 = vector.broadcast %cst_32 : f32 to vector<4x256xf32>
    %76 = arith.select %74, %72, %75 : vector<4x256xi1>, vector<4x256xf32>
    %c5 = arith.constant 5 : index
    %c0_33 = arith.constant 0 : index
    %c0_34 = arith.constant 0 : index
    %77 = vector.load %arg2[%c5, %c0_33, %c0_34] : memref<9x32x4xf32, #tpu.memory_space<vmem>>, vector<1x32x4xf32>
    %78 = vector.shape_cast %77 : vector<1x32x4xf32> to vector<32x4xf32>
    %cst_35 = arith.constant dense<0.000000e+00> : vector<32x256xf32>
    %79 = tpu.matmul %78, %76, %cst_35 {dimension_numbers = #tpu.dot_dimension_numbers<[1], [0], [0], [1], [0, 0, 1, 1], [], []>} : vector<32x4xf32>, vector<4x256xf32>, vector<32x256xf32> -> vector<32x256xf32>
    %80 = arith.addf %71, %79 : vector<32x256xf32>
    %c241_i32 = arith.constant 241 : i32
    %81 = tpu.dynamic_rotate %32 by %c241_i32 dim 1 : vector<4x256xf32>, i32 -> vector<4x256xf32>
    %cst_36 = arith.constant 0.000000e+00 : f32
    %82 = vector.shape_cast %23 : vector<1x256xi1> to vector<1x256xi1>
    %83 = vector.broadcast %82 : vector<1x256xi1> to vector<4x256xi1>
    %84 = vector.broadcast %cst_36 : f32 to vector<4x256xf32>
    %85 = arith.select %83, %81, %84 : vector<4x256xi1>, vector<4x256xf32>
    %c6 = arith.constant 6 : index
    %c0_37 = arith.constant 0 : index
    %c0_38 = arith.constant 0 : index
    %86 = vector.load %arg2[%c6, %c0_37, %c0_38] : memref<9x32x4xf32, #tpu.memory_space<vmem>>, vector<1x32x4xf32>
    %87 = vector.shape_cast %86 : vector<1x32x4xf32> to vector<32x4xf32>
    %cst_39 = arith.constant dense<0.000000e+00> : vector<32x256xf32>
    %88 = tpu.matmul %87, %85, %cst_39 {dimension_numbers = #tpu.dot_dimension_numbers<[1], [0], [0], [1], [0, 0, 1, 1], [], []>} : vector<32x4xf32>, vector<4x256xf32>, vector<32x256xf32> -> vector<32x256xf32>
    %89 = arith.addf %80, %88 : vector<32x256xf32>
    %c240_i32_40 = arith.constant 240 : i32
    %90 = tpu.dynamic_rotate %32 by %c240_i32_40 dim 1 : vector<4x256xf32>, i32 -> vector<4x256xf32>
    %cst_41 = arith.constant 0.000000e+00 : f32
    %91 = vector.shape_cast %25 : vector<1x256xi1> to vector<1x256xi1>
    %92 = vector.broadcast %91 : vector<1x256xi1> to vector<4x256xi1>
    %93 = vector.broadcast %cst_41 : f32 to vector<4x256xf32>
    %94 = arith.select %92, %90, %93 : vector<4x256xi1>, vector<4x256xf32>
    %c7 = arith.constant 7 : index
    %c0_42 = arith.constant 0 : index
    %c0_43 = arith.constant 0 : index
    %95 = vector.load %arg2[%c7, %c0_42, %c0_43] : memref<9x32x4xf32, #tpu.memory_space<vmem>>, vector<1x32x4xf32>
    %96 = vector.shape_cast %95 : vector<1x32x4xf32> to vector<32x4xf32>
    %cst_44 = arith.constant dense<0.000000e+00> : vector<32x256xf32>
    %97 = tpu.matmul %96, %94, %cst_44 {dimension_numbers = #tpu.dot_dimension_numbers<[1], [0], [0], [1], [0, 0, 1, 1], [], []>} : vector<32x4xf32>, vector<4x256xf32>, vector<32x256xf32> -> vector<32x256xf32>
    %98 = arith.addf %89, %97 : vector<32x256xf32>
    %c239_i32 = arith.constant 239 : i32
    %99 = tpu.dynamic_rotate %32 by %c239_i32 dim 1 : vector<4x256xf32>, i32 -> vector<4x256xf32>
    %cst_45 = arith.constant 0.000000e+00 : f32
    %100 = vector.shape_cast %30 : vector<1x256xi1> to vector<1x256xi1>
    %101 = vector.broadcast %100 : vector<1x256xi1> to vector<4x256xi1>
    %102 = vector.broadcast %cst_45 : f32 to vector<4x256xf32>
    %103 = arith.select %101, %99, %102 : vector<4x256xi1>, vector<4x256xf32>
    %c8 = arith.constant 8 : index
    %c0_46 = arith.constant 0 : index
    %c0_47 = arith.constant 0 : index
    %104 = vector.load %arg2[%c8, %c0_46, %c0_47] : memref<9x32x4xf32, #tpu.memory_space<vmem>>, vector<1x32x4xf32>
    %105 = vector.shape_cast %104 : vector<1x32x4xf32> to vector<32x4xf32>
    %cst_48 = arith.constant dense<0.000000e+00> : vector<32x256xf32>
    %106 = tpu.matmul %105, %103, %cst_48 {dimension_numbers = #tpu.dot_dimension_numbers<[1], [0], [0], [1], [0, 0, 1, 1], [], []>} : vector<32x4xf32>, vector<4x256xf32>, vector<32x256xf32> -> vector<32x256xf32>
    %107 = arith.addf %98, %106 : vector<32x256xf32>
    %cst_49 = arith.constant 0.000000e+00 : f32
    %108 = vector.broadcast %cst_49 : f32 to vector<32x256xf32>
    %109 = arith.maximumf %107, %108 : vector<32x256xf32>
    %c17_i32_50 = arith.constant 17 : i32
    %110 = tpu.dynamic_rotate %109 by %c17_i32_50 dim 1 : vector<32x256xf32>, i32 -> vector<32x256xf32>
    %cst_51 = arith.constant 0.000000e+00 : f32
    %111 = vector.shape_cast %7 : vector<1x256xi1> to vector<1x256xi1>
    %112 = vector.broadcast %111 : vector<1x256xi1> to vector<32x256xi1>
    %113 = vector.broadcast %cst_51 : f32 to vector<32x256xf32>
    %114 = arith.select %112, %110, %113 : vector<32x256xi1>, vector<32x256xf32>
    %c0_52 = arith.constant 0 : index
    %c0_53 = arith.constant 0 : index
    %c0_54 = arith.constant 0 : index
    %115 = vector.load %arg3[%c0_52, %c0_53, %c0_54] : memref<9x32x32xf32, #tpu.memory_space<vmem>>, vector<1x32x32xf32>
    %116 = vector.shape_cast %115 : vector<1x32x32xf32> to vector<32x32xf32>
    %cst_55 = arith.constant dense<0.000000e+00> : vector<32x256xf32>
    %117 = tpu.matmul %116, %114, %cst_55 {dimension_numbers = #tpu.dot_dimension_numbers<[1], [0], [0], [1], [0, 0, 1, 1], [], []>} : vector<32x32xf32>, vector<32x256xf32>, vector<32x256xf32> -> vector<32x256xf32>
    %c16_i32_56 = arith.constant 16 : i32
    %118 = tpu.dynamic_rotate %109 by %c16_i32_56 dim 1 : vector<32x256xf32>, i32 -> vector<32x256xf32>
    %cst_57 = arith.constant 0.000000e+00 : f32
    %119 = vector.shape_cast %9 : vector<1x256xi1> to vector<1x256xi1>
    %120 = vector.broadcast %119 : vector<1x256xi1> to vector<32x256xi1>
    %121 = vector.broadcast %cst_57 : f32 to vector<32x256xf32>
    %122 = arith.select %120, %118, %121 : vector<32x256xi1>, vector<32x256xf32>
    %c1_58 = arith.constant 1 : index
    %c0_59 = arith.constant 0 : index
    %c0_60 = arith.constant 0 : index
    %123 = vector.load %arg3[%c1_58, %c0_59, %c0_60] : memref<9x32x32xf32, #tpu.memory_space<vmem>>, vector<1x32x32xf32>
    %124 = vector.shape_cast %123 : vector<1x32x32xf32> to vector<32x32xf32>
    %cst_61 = arith.constant dense<0.000000e+00> : vector<32x256xf32>
    %125 = tpu.matmul %124, %122, %cst_61 {dimension_numbers = #tpu.dot_dimension_numbers<[1], [0], [0], [1], [0, 0, 1, 1], [], []>} : vector<32x32xf32>, vector<32x256xf32>, vector<32x256xf32> -> vector<32x256xf32>
    %126 = arith.addf %117, %125 : vector<32x256xf32>
    %c15_i32_62 = arith.constant 15 : i32
    %127 = tpu.dynamic_rotate %109 by %c15_i32_62 dim 1 : vector<32x256xf32>, i32 -> vector<32x256xf32>
    %cst_63 = arith.constant 0.000000e+00 : f32
    %128 = vector.shape_cast %14 : vector<1x256xi1> to vector<1x256xi1>
    %129 = vector.broadcast %128 : vector<1x256xi1> to vector<32x256xi1>
    %130 = vector.broadcast %cst_63 : f32 to vector<32x256xf32>
    %131 = arith.select %129, %127, %130 : vector<32x256xi1>, vector<32x256xf32>
    %c2_64 = arith.constant 2 : index
    %c0_65 = arith.constant 0 : index
    %c0_66 = arith.constant 0 : index
    %132 = vector.load %arg3[%c2_64, %c0_65, %c0_66] : memref<9x32x32xf32, #tpu.memory_space<vmem>>, vector<1x32x32xf32>
    %133 = vector.shape_cast %132 : vector<1x32x32xf32> to vector<32x32xf32>
    %cst_67 = arith.constant dense<0.000000e+00> : vector<32x256xf32>
    %134 = tpu.matmul %133, %131, %cst_67 {dimension_numbers = #tpu.dot_dimension_numbers<[1], [0], [0], [1], [0, 0, 1, 1], [], []>} : vector<32x32xf32>, vector<32x256xf32>, vector<32x256xf32> -> vector<32x256xf32>
    %135 = arith.addf %126, %134 : vector<32x256xf32>
    %c1_i32_68 = arith.constant 1 : i32
    %136 = tpu.dynamic_rotate %109 by %c1_i32_68 dim 1 : vector<32x256xf32>, i32 -> vector<32x256xf32>
    %cst_69 = arith.constant 0.000000e+00 : f32
    %137 = vector.shape_cast %16 : vector<1x256xi1> to vector<1x256xi1>
    %138 = vector.broadcast %137 : vector<1x256xi1> to vector<32x256xi1>
    %139 = vector.broadcast %cst_69 : f32 to vector<32x256xf32>
    %140 = arith.select %138, %136, %139 : vector<32x256xi1>, vector<32x256xf32>
    %c3_70 = arith.constant 3 : index
    %c0_71 = arith.constant 0 : index
    %c0_72 = arith.constant 0 : index
    %141 = vector.load %arg3[%c3_70, %c0_71, %c0_72] : memref<9x32x32xf32, #tpu.memory_space<vmem>>, vector<1x32x32xf32>
    %142 = vector.shape_cast %141 : vector<1x32x32xf32> to vector<32x32xf32>
    %cst_73 = arith.constant dense<0.000000e+00> : vector<32x256xf32>
    %143 = tpu.matmul %142, %140, %cst_73 {dimension_numbers = #tpu.dot_dimension_numbers<[1], [0], [0], [1], [0, 0, 1, 1], [], []>} : vector<32x32xf32>, vector<32x256xf32>, vector<32x256xf32> -> vector<32x256xf32>
    %144 = arith.addf %135, %143 : vector<32x256xf32>
    %c4_74 = arith.constant 4 : index
    %c0_75 = arith.constant 0 : index
    %c0_76 = arith.constant 0 : index
    %145 = vector.load %arg3[%c4_74, %c0_75, %c0_76] : memref<9x32x32xf32, #tpu.memory_space<vmem>>, vector<1x32x32xf32>
    %146 = vector.shape_cast %145 : vector<1x32x32xf32> to vector<32x32xf32>
    %cst_77 = arith.constant dense<0.000000e+00> : vector<32x256xf32>
    %147 = tpu.matmul %146, %109, %cst_77 {dimension_numbers = #tpu.dot_dimension_numbers<[1], [0], [0], [1], [0, 0, 1, 1], [], []>} : vector<32x32xf32>, vector<32x256xf32>, vector<32x256xf32> -> vector<32x256xf32>
    %148 = arith.addf %144, %147 : vector<32x256xf32>
    %c255_i32_78 = arith.constant 255 : i32
    %149 = tpu.dynamic_rotate %109 by %c255_i32_78 dim 1 : vector<32x256xf32>, i32 -> vector<32x256xf32>
    %cst_79 = arith.constant 0.000000e+00 : f32
    %150 = vector.shape_cast %18 : vector<1x256xi1> to vector<1x256xi1>
    %151 = vector.broadcast %150 : vector<1x256xi1> to vector<32x256xi1>
    %152 = vector.broadcast %cst_79 : f32 to vector<32x256xf32>
    %153 = arith.select %151, %149, %152 : vector<32x256xi1>, vector<32x256xf32>
    %c5_80 = arith.constant 5 : index
    %c0_81 = arith.constant 0 : index
    %c0_82 = arith.constant 0 : index
    %154 = vector.load %arg3[%c5_80, %c0_81, %c0_82] : memref<9x32x32xf32, #tpu.memory_space<vmem>>, vector<1x32x32xf32>
    %155 = vector.shape_cast %154 : vector<1x32x32xf32> to vector<32x32xf32>
    %cst_83 = arith.constant dense<0.000000e+00> : vector<32x256xf32>
    %156 = tpu.matmul %155, %153, %cst_83 {dimension_numbers = #tpu.dot_dimension_numbers<[1], [0], [0], [1], [0, 0, 1, 1], [], []>} : vector<32x32xf32>, vector<32x256xf32>, vector<32x256xf32> -> vector<32x256xf32>
    %157 = arith.addf %148, %156 : vector<32x256xf32>
    %c241_i32_84 = arith.constant 241 : i32
    %158 = tpu.dynamic_rotate %109 by %c241_i32_84 dim 1 : vector<32x256xf32>, i32 -> vector<32x256xf32>
    %cst_85 = arith.constant 0.000000e+00 : f32
    %159 = vector.shape_cast %23 : vector<1x256xi1> to vector<1x256xi1>
    %160 = vector.broadcast %159 : vector<1x256xi1> to vector<32x256xi1>
    %161 = vector.broadcast %cst_85 : f32 to vector<32x256xf32>
    %162 = arith.select %160, %158, %161 : vector<32x256xi1>, vector<32x256xf32>
    %c6_86 = arith.constant 6 : index
    %c0_87 = arith.constant 0 : index
    %c0_88 = arith.constant 0 : index
    %163 = vector.load %arg3[%c6_86, %c0_87, %c0_88] : memref<9x32x32xf32, #tpu.memory_space<vmem>>, vector<1x32x32xf32>
    %164 = vector.shape_cast %163 : vector<1x32x32xf32> to vector<32x32xf32>
    %cst_89 = arith.constant dense<0.000000e+00> : vector<32x256xf32>
    %165 = tpu.matmul %164, %162, %cst_89 {dimension_numbers = #tpu.dot_dimension_numbers<[1], [0], [0], [1], [0, 0, 1, 1], [], []>} : vector<32x32xf32>, vector<32x256xf32>, vector<32x256xf32> -> vector<32x256xf32>
    %166 = arith.addf %157, %165 : vector<32x256xf32>
    %c240_i32_90 = arith.constant 240 : i32
    %167 = tpu.dynamic_rotate %109 by %c240_i32_90 dim 1 : vector<32x256xf32>, i32 -> vector<32x256xf32>
    %cst_91 = arith.constant 0.000000e+00 : f32
    %168 = vector.shape_cast %25 : vector<1x256xi1> to vector<1x256xi1>
    %169 = vector.broadcast %168 : vector<1x256xi1> to vector<32x256xi1>
    %170 = vector.broadcast %cst_91 : f32 to vector<32x256xf32>
    %171 = arith.select %169, %167, %170 : vector<32x256xi1>, vector<32x256xf32>
    %c7_92 = arith.constant 7 : index
    %c0_93 = arith.constant 0 : index
    %c0_94 = arith.constant 0 : index
    %172 = vector.load %arg3[%c7_92, %c0_93, %c0_94] : memref<9x32x32xf32, #tpu.memory_space<vmem>>, vector<1x32x32xf32>
    %173 = vector.shape_cast %172 : vector<1x32x32xf32> to vector<32x32xf32>
    %cst_95 = arith.constant dense<0.000000e+00> : vector<32x256xf32>
    %174 = tpu.matmul %173, %171, %cst_95 {dimension_numbers = #tpu.dot_dimension_numbers<[1], [0], [0], [1], [0, 0, 1, 1], [], []>} : vector<32x32xf32>, vector<32x256xf32>, vector<32x256xf32> -> vector<32x256xf32>
    %175 = arith.addf %166, %174 : vector<32x256xf32>
    %c239_i32_96 = arith.constant 239 : i32
    %176 = tpu.dynamic_rotate %109 by %c239_i32_96 dim 1 : vector<32x256xf32>, i32 -> vector<32x256xf32>
    %cst_97 = arith.constant 0.000000e+00 : f32
    %177 = vector.shape_cast %30 : vector<1x256xi1> to vector<1x256xi1>
    %178 = vector.broadcast %177 : vector<1x256xi1> to vector<32x256xi1>
    %179 = vector.broadcast %cst_97 : f32 to vector<32x256xf32>
    %180 = arith.select %178, %176, %179 : vector<32x256xi1>, vector<32x256xf32>
    %c8_98 = arith.constant 8 : index
    %c0_99 = arith.constant 0 : index
    %c0_100 = arith.constant 0 : index
    %181 = vector.load %arg3[%c8_98, %c0_99, %c0_100] : memref<9x32x32xf32, #tpu.memory_space<vmem>>, vector<1x32x32xf32>
    %182 = vector.shape_cast %181 : vector<1x32x32xf32> to vector<32x32xf32>
    %cst_101 = arith.constant dense<0.000000e+00> : vector<32x256xf32>
    %183 = tpu.matmul %182, %180, %cst_101 {dimension_numbers = #tpu.dot_dimension_numbers<[1], [0], [0], [1], [0, 0, 1, 1], [], []>} : vector<32x32xf32>, vector<32x256xf32>, vector<32x256xf32> -> vector<32x256xf32>
    %184 = arith.addf %175, %183 : vector<32x256xf32>
    %cst_102 = arith.constant 0.000000e+00 : f32
    %185 = vector.broadcast %cst_102 : f32 to vector<32x256xf32>
    %186 = arith.maximumf %184, %185 : vector<32x256xf32>
    %187 = tpu.transpose %186, [1, 0] : vector<32x256xf32> -> vector<256x32xf32>
    %c0_103 = arith.constant 0 : index
    %c0_104 = arith.constant 0 : index
    %c0_105 = arith.constant 0 : index
    %188 = vector.load %arg4[%c0_103, %c0_104, %c0_105] : memref<1x256x32xf32, #tpu.memory_space<vmem>>, vector<1x256x32xf32>
    %189 = vector.shape_cast %188 : vector<1x256x32xf32> to vector<256x32xf32>
    %190 = vector.shape_cast %187 : vector<256x32xf32> to vector<1x256x32xf32>
    tpu.vector_store %arg4[%c0_103, %c0_104, %c0_105], %190 {strides = array<i32>} : memref<1x256x32xf32, #tpu.memory_space<vmem>>, vector<1x256x32xf32>,
    return
  }
  func.func @transform_0(%arg0: i32) -> (i32, i32, i32) {
    %c0_i32 = arith.constant 0 : i32
    %c0_i32_0 = arith.constant 0 : i32
    %c0_i32_1 = arith.constant 0 : i32
    return %arg0, %c0_i32, %c0_i32_0 : i32, i32, i32
  }
  func.func @transform_1(%arg0: i32) -> (i32, i32, i32) {
    %c0_i32 = arith.constant 0 : i32
    %c0_i32_0 = arith.constant 0 : i32
    %c0_i32_1 = arith.constant 0 : i32
    %c0_i32_2 = arith.constant 0 : i32
    return %c0_i32, %c0_i32_0, %c0_i32_1 : i32, i32, i32
  }
  func.func @transform_2(%arg0: i32) -> (i32, i32, i32) {
    %c0_i32 = arith.constant 0 : i32
    %c0_i32_0 = arith.constant 0 : i32
    %c0_i32_1 = arith.constant 0 : i32
    %c0_i32_2 = arith.constant 0 : i32
    return %c0_i32, %c0_i32_0, %c0_i32_1 : i32, i32, i32
  }
  func.func @transform_3(%arg0: i32) -> (i32, i32, i32) {
    %c0_i32 = arith.constant 0 : i32
    %c0_i32_0 = arith.constant 0 : i32
    %c0_i32_1 = arith.constant 0 : i32
    return %arg0, %c0_i32, %c0_i32_0 : i32, i32, i32
  }
}

</mosaic_0001>

<llo_original>
// kernel: conv_module_forward.1
$region0: #{conv_module_forward.1}
  #allocation0 [shape = 'u32[]', space=smem, size = 0x4, offset = 0x4, fixed_abs, tag = 'smem constant byte address 0x4 - core index']
  #allocation1 [shape = 'u32[144,128]{1,0:T(1,128)}', space=vmem, size = 0x12000, scoped, tag = 'internal scratch']
  %s0 = inlined_call_operand.vmem [shape: f32[2,4,256], index: 0, kind: input, shape index: {}]
  %s1 = inlined_call_operand.vmem [shape: f32[9,32,4], index: 1, kind: input, shape index: {}]
  %s2 = inlined_call_operand.vmem [shape: f32[9,32,32], index: 2, kind: input, shape index: {}]
  %s3 = inlined_call_operand.vmem [shape: f32[2,256,32], index: 3, kind: output, shape index: {}]
  %s4 = sld [smem:[#allocation0]]
  $region45: #{conv_module_forward.1} parent=0
    _
  %s6 = ssub.s32 1, %s4
  %s7 = scalar_select 0, %s6, %s4
  loop: start=0, step=1, limit=4
  $region2: #{conv_module_forward.1} parent=0 // loop_pre_header
    _
  $region3: #{conv_module_forward.1} parent=0 // loop_header
    %s9 = sphi 0, %s13
    %p10 = scmp.ge.s32.totalorder %s9, 4
    %s19 = sphi 0, %s21
    %s22 = sphi 0, %s19
    %s23 = sphi 0, %s22
    %s39 = sphi 0, %s23
    %s43 = sphi 0, %s43
    %s45 = sphi 0, %s43
    %s46 = sphi 0, %s45
    %s60 = sphi 0, %s46
    %s64 = sphi 0, %s64
    %s66 = sphi 0, %s64
    %s67 = sphi 0, %s66
    %s81 = sphi 0, %s67
    %s87 = sphi 0, %s89
    %s90 = sphi 0, %s87
    %s91 = sphi 0, %s90
    %s107 = sphi 0, %s91
  $region4: #{conv_module_forward.1} parent=0 // loop_header_branch
    %12 = sbr.rel (%p10) target = $region8
  $region5: #{conv_module_forward.1} parent=0 // loop_body
    %s14 = ssub.s32 %s9, 1
    %s15 = ssub.s32 %s9, 2
    %s16 = sadd.s32 %s9, 1
    %s17 = ssub.s32 %s9, %s16
    %p18 = scmp.eq.s32.totalorder %s17, 0
    %s20 = sadd.s32 %s19, 1
    %s21 = scalar_select %p18, %s19, %s20
    %p24 = pneg %p18
    %p25 = scmp.eq.s32.totalorder %s9, 1
    %p26 = por %p24, %p25
    %p27 = scmp.ne.s32.totalorder %s19, %s22
    %p28 = scmp.eq.s32.totalorder %s9, 0
    %p29 = por %p27, %p28
    %p30 = scmp.ne.s32.totalorder %s19, %s22
    %p31 = scmp.eq.s32.totalorder %s14, 1
    %p32 = por %p30, %p31
    %p33 = scmp.ne.s32.totalorder %s22, %s23
    %p34 = scmp.eq.s32.totalorder %s14, 0
    %p35 = por %p33, %p34
    %p36 = scmp.ne.s32.totalorder %s22, %s23
    %p37 = scmp.eq.s32.totalorder %s15, 1
    %p38 = por %p36, %p37
    %p40 = scmp.ne.s32.totalorder %s23, %s39
    %p41 = scmp.eq.s32.totalorder %s15, 0
    %p42 = por %p40, %p41
    %s44 = sadd.s32 %s43, 1
    %p47 = scmp.eq.s32.totalorder %s9, 1
    %p48 = scmp.ne.s32.totalorder %s43, %s45
    %p49 = scmp.eq.s32.totalorder %s9, 0
    %p50 = por %p48, %p49
    %p51 = scmp.ne.s32.totalorder %s43, %s45
    %p52 = scmp.eq.s32.totalorder %s14, 1
    %p53 = por %p51, %p52
    %p54 = scmp.ne.s32.totalorder %s45, %s46
    %p55 = scmp.eq.s32.totalorder %s14, 0
    %p56 = por %p54, %p55
    %p57 = scmp.ne.s32.totalorder %s45, %s46
    %p58 = scmp.eq.s32.totalorder %s15, 1
    %p59 = por %p57, %p58
    %p61 = scmp.ne.s32.totalorder %s46, %s60
    %p62 = scmp.eq.s32.totalorder %s15, 0
    %p63 = por %p61, %p62
    %s65 = sadd.s32 %s64, 1
    %p68 = scmp.eq.s32.totalorder %s9, 1
    %p69 = scmp.ne.s32.totalorder %s64, %s66
    %p70 = scmp.eq.s32.totalorder %s9, 0
    %p71 = por %p69, %p70
    %p72 = scmp.ne.s32.totalorder %s64, %s66
    %p73 = scmp.eq.s32.totalorder %s14, 1
    %p74 = por %p72, %p73
    %p75 = scmp.ne.s32.totalorder %s66, %s67
    %p76 = scmp.eq.s32.totalorder %s14, 0
    %p77 = por %p75, %p76
    %p78 = scmp.ne.s32.totalorder %s66, %s67
    %p79 = scmp.eq.s32.totalorder %s15, 1
    %p80 = por %p78, %p79
    %p82 = scmp.ne.s32.totalorder %s67, %s81
    %p83 = scmp.eq.s32.totalorder %s15, 0
    %p84 = por %p82, %p83
    %s85 = ssub.s32 %s9, %s16
    %p86 = scmp.eq.s32.totalorder %s85, 0
    %s88 = sadd.s32 %s87, 1
    %s89 = scalar_select %p86, %s87, %s88
    %p92 = pneg %p86
    %p93 = scmp.eq.s32.totalorder %s9, 1
    %p94 = por %p92, %p93
    %p95 = scmp.ne.s32.totalorder %s87, %s90
    %p96 = scmp.eq.s32.totalorder %s9, 0
    %p97 = por %p95, %p96
    %p98 = scmp.ne.s32.totalorder %s87, %s90
    %p99 = scmp.eq.s32.totalorder %s14, 1
    %p100 = por %p98, %p99
    %p101 = scmp.ne.s32.totalorder %s90, %s91
    %p102 = scmp.eq.s32.totalorder %s14, 0
    %p103 = por %p101, %p102
    %p104 = scmp.ne.s32.totalorder %s90, %s91
    %p105 = scmp.eq.s32.totalorder %s15, 1
    %p106 = por %p104, %p105
    %p108 = scmp.ne.s32.totalorder %s91, %s107
    %p109 = scmp.eq.s32.totalorder %s15, 0
    %p110 = por %p108, %p109
    %p111 = scmp.le.s32.totalorder 1, %s9
    %p112 = scmp.lt.s32.totalorder %s9, 3
    %p113 = pnand %p111, %p112
    %p114 = pneg %p113
    // Predicated region
    $region9: #{conv_module_forward.1} parent=5 // pred_check
      _
    $region10: #{conv_module_forward.1} parent=5 // pred_check_branch
      %116 = sbr.rel (%p113) target = $region12
    $region11: #{conv_module_forward.1} parent=5 // pred_region
      %s117 = ssub.s32 %s9, 1
      // Predicated region
      $region13: #{conv_module_forward.1} parent=11 // pred_check
        %p118 = pneg %p56
      $region14: #{conv_module_forward.1} parent=11 // pred_check_branch
        %120 = sbr.rel (%p118) target = $region16
      $region15: #{conv_module_forward.1} parent=11 // pred_region
        _
      $region16: #{conv_module_forward.1} parent=11 // pred_fallthru
        _
      // Predicated region
      $region17: #{conv_module_forward.1} parent=11 // pred_check
        %p121 = pneg %p77
      $region18: #{conv_module_forward.1} parent=11 // pred_check_branch
        %123 = sbr.rel (%p121) target = $region20
      $region19: #{conv_module_forward.1} parent=11 // pred_region
        _
      $region20: #{conv_module_forward.1} parent=11 // pred_fallthru
        _
    $region12: #{conv_module_forward.1} parent=5 // pred_fallthru
      _
    %p124 = scmp.lt.s32.totalorder %s9, 2
    // Predicated region
    $region21: #{conv_module_forward.1} parent=5 // pred_check
      %p125 = pneg %p124
    $region22: #{conv_module_forward.1} parent=5 // pred_check_branch
      %127 = sbr.rel (%p125) target = $region24
    $region23: #{conv_module_forward.1} parent=5 // pred_region
      // Predicated region
      $region25: #{conv_module_forward.1} parent=23 // pred_check
        %p128 = pneg %p29
      $region26: #{conv_module_forward.1} parent=23 // pred_check_branch
        %130 = sbr.rel (%p128) target = $region28
      $region27: #{conv_module_forward.1} parent=23 // pred_region
        %p131 = scmp.lt.s32.totalorder %s9, 1
        %s132 = scalar_select %p131, %s9, 1
        %s133 = smul.addr %s132, 2
        %s134 = smul.addr %s133, 4
        %s135 = scalar_lea.vmem %s0, %s134
      $region28: #{conv_module_forward.1} parent=23 // pred_fallthru
        _
    $region24: #{conv_module_forward.1} parent=5 // pred_fallthru
      _
    %p136 = scmp.le.s32.totalorder 1, %s9
    %p137 = scmp.lt.s32.totalorder %s9, 3
    %p138 = pnand %p136, %p137
    %p139 = pneg %p138
    // Predicated region
    $region29: #{conv_module_forward.1} parent=5 // pred_check
      _
    $region30: #{conv_module_forward.1} parent=5 // pred_check_branch
      %141 = sbr.rel (%p138) target = $region32
    $region31: #{conv_module_forward.1} parent=5 // pred_region
      %s142 = ssub.s32 %s9, 1
      %p143 = scmp.lt.s32.totalorder %s14, 1
      %s144 = scalar_select %p143, %s14, 1
      %s145 = smul.addr %s144, 2
      %s146 = smul.addr %s145, 4
      %s147 = scalar_lea.vmem %s0, %s146
      %p148 = pneg %p35
      %p149 = pneg %p32
      %p150 = pneg %p56
      %p151 = pneg %p53
      %p152 = pneg %p77
      %p153 = pneg %p74
      %p154 = pneg %p103
      %p155 = pneg %p100
      %p156 = scmp.lt.s32.totalorder %s14, 1
      %s157 = scalar_select %p156, %s14, 1
      %s158 = smul.addr %s157, 32
      %s159 = smul.addr %s158, 8
      %s160 = scalar_lea.vmem %s3, %s159
      %p161 = scmp.lt.s32.totalorder %s14, 1
      %s162 = scalar_select %p161, %s14, 1
      %s163 = smul.addr %s162, 2
      %s164 = smul.addr %s163, 4
      %s165 = scalar_lea.vmem %s0, %s164
      %p166 = scmp.lt.s32.totalorder %s14, 1
      %s167 = scalar_select %p166, %s14, 1
      %s168 = smul.addr %s167, 32
      %s169 = smul.addr %s168, 8
      %s170 = scalar_lea.vmem %s3, %s169
      %v171 = vlaneseq
      %v172 = vand.u32 %v171, 127
      %v173 = vadd.s32 %v172, 128
      %v174 = vand.u32 %v172, 15
      %v175 = vand.u32 %v173, 15
      %vm176 = vcmp.ge.s32.totalorder %v172, 16
      %vm177 = vcmp.ge.s32.totalorder %v173, 16
      %vm178 = vcmp.ge.s32.totalorder %v174, 1
      %vm179 = vcmp.ge.s32.totalorder %v175, 1
      %vm180 = vmand %vm176, %vm178
      %vm181 = vmand %vm177, %vm179
      %vm182 = vcmp.le.s32.totalorder %v174, 14
      %vm183 = vcmp.le.s32.totalorder %v175, 14
      %vm184 = vmand %vm176, %vm182
      %vm185 = vmand %vm177, %vm183
      %vm186 = vcmp.lt.s32.totalorder %v172, 240
      %vm187 = vcmp.lt.s32.totalorder %v173, 240
      %vm188 = vmand %vm186, %vm178
      %vm189 = vmand %vm187, %vm179
      %vm190 = vmand %vm186, %vm182
      %vm191 = vmand %vm187, %vm183
      %v192 = vld [vmem:[%s165] sm:$0xff]
      %v194 = vcombine.high %v192, %v192
      %196 = vrot.lane.b32.xlu0 %v192, 17
      %v197 = vpop.permute.xlu0 %196
      %198 = vrot.lane.b32.xlu0 %v194, 17
      %v199 = vpop.permute.xlu0 %198
      %vm200 = vcmp.lt.s32.totalorder %v172, 17
      %v201 = vsel %vm200, %v197, %v199
      %v202 = vsel %vm200, %v199, %v197
      %v203 = vsel %vm180, 1, 0
      %v204 = vsel %vm181, 1, 0
      %vm205 = vcmp.eq.s32.totalorder %v203, 1
      %vm206 = vcmp.eq.s32.totalorder %v204, 1
      %v207 = vsel %vm205, %v202, 0.0
      %v208 = vsel %vm206, %v201, 0.0
      %v209 = vld [vmem:[%s1] sm:$0xff]
      %v210 = vld [vmem:[%s1 + $0x8] sm:$0xff]
      %v211 = vld [vmem:[%s1 + $0x10] sm:$0xff]
      %v212 = vld [vmem:[%s1 + $0x18] sm:$0xff]
      %213 = vrot.lane.b32.xlu0 %v192, 16
      %v214 = vpop.permute.xlu0 %213
      %215 = vrot.lane.b32.xlu0 %v194, 16
      %v216 = vpop.permute.xlu0 %215
      %vm217 = vcmp.lt.s32.totalorder %v172, 16
      %v218 = vsel %vm217, %v214, %v216
      %v219 = vsel %vm217, %v216, %v214
      %v220 = vsel %vm176, 1, 0
      %v221 = vsel %vm177, 1, 0
      %vm222 = vcmp.eq.s32.totalorder %v220, 1
      %vm223 = vcmp.eq.s32.totalorder %v221, 1
      %v224 = vsel %vm222, %v219, 0.0
      %v225 = vsel %vm223, %v218, 0.0
      %s226 = scalar_lea.vmem %s1, 32
      %v227 = vld [vmem:[%s226] sm:$0xff]
      %v228 = vld [vmem:[%s226 + $0x8] sm:$0xff]
      %v229 = vld [vmem:[%s226 + $0x10] sm:$0xff]
      %v230 = vld [vmem:[%s226 + $0x18] sm:$0xff]
      %vm231 = vcmask 31744
      %v233 = vsel %vm231, %v227, 0
      %v236 = vsel %vm231, %v228, 0
      %v239 = vsel %vm231, %v229, 0
      %v242 = vsel %vm231, %v230, 0
      %vm244 = vcmask 1043456
      %v246 = vsel %vm244, %v224, 0
      %v249 = vsel %vm244, %v225, 0
      %251 = vmatprep.subr.mxu0 %v249
      %252 = vmatpush1.msra.mxu0 %v246
      %253 = vmatprep.subr.mxu0 0.0
      %254 = vmatpush1.msra.mxu0 0.0
      %255 = vmatprep.subr.mxu0 0.0
      %256 = vmatpush1.msra.mxu0 0.0
      %257 = vmatprep.subr.mxu0 0.0
      %258 = vmatpush1.msra.mxu0 0.0
      %259 = vmatprep.subr.mxu0 0.0
      %260 = vmatpush1.msra.mxu0 0.0
      %261 = vmatprep.subr.mxu0 0.0
      %262 = vmatpush1.msra.mxu0 0.0
      %263 = vmatprep.subr.mxu0 0.0
      %264 = vmatpush1.msra.mxu0 0.0
      %265 = vmatprep.subr.mxu0 0.0
      %266 = vmatpush1.msra.mxu0 0.0
      %267 = vmatprep.subr.mxu0 0.0
      %268 = vmatpush1.msra.mxu0 0.0
      %269 = vmatprep.subr.mxu0 0.0
      %270 = vmatpush1.msra.mxu0 0.0
      %271 = vmatprep.subr.mxu0 0.0
      %272 = vmatpush1.msra.mxu0 0.0
      %273 = vmatprep.subr.mxu0 0.0
      %274 = vmatpush1.msra.mxu0 0.0
      %275 = vmatprep.subr.mxu0 0.0
      %276 = vmatpush1.msra.mxu0 0.0
      %277 = vmatprep.subr.mxu0 0.0
      %278 = vmatpush1.msra.mxu0 0.0
      %279 = vmatprep.subr.mxu0 0.0
      %280 = vmatpush1.msra.mxu0 0.0
      %281 = vmatprep.subr.mxu0 0.0
      %282 = vmatpush1.msra.mxu0 0.0
      %283 = vmatprep.subr.mxu0 0.0
      %284 = vmatpush1.msra.mxu0 0.0
      %285 = vmatprep.subr.mxu0 0.0
      %286 = vmatpush1.msra.mxu0 0.0
      %287 = vmatprep.subr.mxu0 0.0
      %288 = vmatpush1.msra.mxu0 0.0
      %289 = vmatprep.subr.mxu0 0.0
      %290 = vmatpush1.msra.mxu0 0.0
      %291 = vmatprep.subr.mxu0 0.0
      %292 = vmatpush1.msra.mxu0 0.0
      %293 = vmatprep.subr.mxu0 0.0
      %294 = vmatpush1.msra.mxu0 0.0
      %295 = vmatprep.subr.mxu0 0.0
      %296 = vmatpush1.msra.mxu0 0.0
      %297 = vmatprep.subr.mxu0 0.0
      %298 = vmatpush1.msra.mxu0 0.0
      %299 = vmatprep.subr.mxu0 0.0
      %300 = vmatpush1.msra.mxu0 0.0
      %301 = vmatprep.subr.mxu0 0.0
      %302 = vmatpush1.msra.mxu0 0.0
      %303 = vmatprep.subr.mxu0 0.0
      %304 = vmatpush1.msra.mxu0 0.0
      %305 = vmatprep.subr.mxu0 0.0
      %306 = vmatpush1.msra.mxu0 0.0
      %307 = vmatprep.subr.mxu0 0.0
      %308 = vmatpush1.msra.mxu0 0.0
      %309 = vmatprep.subr.mxu0 0.0
      %310 = vmatpush1.msra.mxu0 0.0
      %311 = vmatprep.subr.mxu0 0.0
      %312 = vmatpush1.msra.mxu0 0.0
      %313 = vmatprep.subr.mxu0 0.0
      %314 = vmatpush1.msra.mxu0 0.0
      %315 = vmatprep.mubr.f32.mxu0 0.0
      %316 = vmatmul.mubr.f32.gmra.mrb[0].mxu0 %v233
      %v317 = vpop.f32.mrb[0].mxu0
      %v318 = vadd.f32 0.0, %v317
      %v319 = vpop.f32.mrb[0].mxu0
      %v320 = vadd.f32 0.0, %v319
      %321 = vmatprep.mubr.f32.mxu0 0.0
      %322 = vmatmul.mubr.f32.gmra.mrb[0].mxu0 %v236
      %v323 = vpop.f32.mrb[0].mxu0
      %v324 = vadd.f32 0.0, %v323
      %v325 = vpop.f32.mrb[0].mxu0
      %v326 = vadd.f32 0.0, %v325
      %327 = vmatprep.mubr.f32.mxu0 0.0
      %328 = vmatmul.mubr.f32.gmra.mrb[0].mxu0 %v239
      %v329 = vpop.f32.mrb[0].mxu0
      %v330 = vadd.f32 0.0, %v329
      %v331 = vpop.f32.mrb[0].mxu0
      %v332 = vadd.f32 0.0, %v331
      %333 = vmatprep.mubr.f32.mxu0 0.0
      %334 = vmatmul.mubr.f32.gmra.mrb[0].mxu0 %v242
      %v335 = vpop.f32.mrb[0].mxu0
      %v336 = vadd.f32 0.0, %v335
      %v337 = vpop.f32.mrb[0].mxu0
      %v338 = vadd.f32 0.0, %v337
      %339 = vdwg.mxu0
      %v341 = vsel %vm231, %v209, 0
      %v344 = vsel %vm231, %v210, 0
      %v347 = vsel %vm231, %v211, 0
      %v350 = vsel %vm231, %v212, 0
      %v353 = vsel %vm244, %v207, 0
      %v356 = vsel %vm244, %v208, 0
      %358 = vmatprep.subr.mxu0 %v356
      %359 = vmatpush1.msra.mxu0 %v353
      %360 = vmatprep.subr.mxu0 0.0
      %361 = vmatpush1.msra.mxu0 0.0
      %362 = vmatprep.subr.mxu0 0.0
      %363 = vmatpush1.msra.mxu0 0.0
      %364 = vmatprep.subr.mxu0 0.0
      %365 = vmatpush1.msra.mxu0 0.0
      %366 = vmatprep.subr.mxu0 0.0
      %367 = vmatpush1.msra.mxu0 0.0
      %368 = vmatprep.subr.mxu0 0.0
      %369 = vmatpush1.msra.mxu0 0.0
      %370 = vmatprep.subr.mxu0 0.0
      %371 = vmatpush1.msra.mxu0 0.0
      %372 = vmatprep.subr.mxu0 0.0
      %373 = vmatpush1.msra.mxu0 0.0
      %374 = vmatprep.subr.mxu0 0.0
      %375 = vmatpush1.msra.mxu0 0.0
      %376 = vmatprep.subr.mxu0 0.0
      %377 = vmatpush1.msra.mxu0 0.0
      %378 = vmatprep.subr.mxu0 0.0
      %379 = vmatpush1.msra.mxu0 0.0
      %380 = vmatprep.subr.mxu0 0.0
      %381 = vmatpush1.msra.mxu0 0.0
      %382 = vmatprep.subr.mxu0 0.0
      %383 = vmatpush1.msra.mxu0 0.0
      %384 = vmatprep.subr.mxu0 0.0
      %385 = vmatpush1.msra.mxu0 0.0
      %386 = vmatprep.subr.mxu0 0.0
      %387 = vmatpush1.msra.mxu0 0.0
      %388 = vmatprep.subr.mxu0 0.0
      %389 = vmatpush1.msra.mxu0 0.0
      %390 = vmatprep.subr.mxu0 0.0
      %391 = vmatpush1.msra.mxu0 0.0
      %392 = vmatprep.subr.mxu0 0.0
      %393 = vmatpush1.msra.mxu0 0.0
      %394 = vmatprep.subr.mxu0 0.0
      %395 = vmatpush1.msra.mxu0 0.0
      %396 = vmatprep.subr.mxu0 0.0
      %397 = vmatpush1.msra.mxu0 0.0
      %398 = vmatprep.subr.mxu0 0.0
      %399 = vmatpush1.msra.mxu0 0.0
      %400 = vmatprep.subr.mxu0 0.0
      %401 = vmatpush1.msra.mxu0 0.0
      %402 = vmatprep.subr.mxu0 0.0
      %403 = vmatpush1.msra.mxu0 0.0
      %404 = vmatprep.subr.mxu0 0.0
      %405 = vmatpush1.msra.mxu0 0.0
      %406 = vmatprep.subr.mxu0 0.0
      %407 = vmatpush1.msra.mxu0 0.0
      %408 = vmatprep.subr.mxu0 0.0
      %409 = vmatpush1.msra.mxu0 0.0
      %410 = vmatprep.subr.mxu0 0.0
      %411 = vmatpush1.msra.mxu0 0.0
      %412 = vmatprep.subr.mxu0 0.0
      %413 = vmatpush1.msra.mxu0 0.0
      %414 = vmatprep.subr.mxu0 0.0
      %415 = vmatpush1.msra.mxu0 0.0
      %416 = vmatprep.subr.mxu0 0.0
      %417 = vmatpush1.msra.mxu0 0.0
      %418 = vmatprep.subr.mxu0 0.0
      %419 = vmatpush1.msra.mxu0 0.0
      %420 = vmatprep.subr.mxu0 0.0
      %421 = vmatpush1.msra.mxu0 0.0
      %422 = vmatprep.mubr.f32.mxu0 0.0
      %423 = vmatmul.mubr.f32.gmra.mrb[0].mxu0 %v341
      %v424 = vpop.f32.mrb[0].mxu0
      %v425 = vadd.f32 %v318, %v424
      %v426 = vpop.f32.mrb[0].mxu0
      %v427 = vadd.f32 %v320, %v426
      %428 = vmatprep.mubr.f32.mxu0 0.0
      %429 = vmatmul.mubr.f32.gmra.mrb[0].mxu0 %v344
      %v430 = vpop.f32.mrb[0].mxu0
      %v431 = vadd.f32 %v324, %v430
      %v432 = vpop.f32.mrb[0].mxu0
      %v433 = vadd.f32 %v326, %v432
      %434 = vmatprep.mubr.f32.mxu0 0.0
      %435 = vmatmul.mubr.f32.gmra.mrb[0].mxu0 %v347
      %v436 = vpop.f32.mrb[0].mxu0
      %v437 = vadd.f32 %v330, %v436
      %v438 = vpop.f32.mrb[0].mxu0
      %v439 = vadd.f32 %v332, %v438
      %440 = vmatprep.mubr.f32.mxu0 0.0
      %441 = vmatmul.mubr.f32.gmra.mrb[0].mxu0 %v350
      %v442 = vpop.f32.mrb[0].mxu0
      %v443 = vadd.f32 %v336, %v442
      %v444 = vpop.f32.mrb[0].mxu0
      %v445 = vadd.f32 %v338, %v444
      %446 = vdwg.mxu0
      %447 = vrot.lane.b32.xlu0 %v192, 15
      %v448 = vpop.permute.xlu0 %447
      %449 = vrot.lane.b32.xlu0 %v194, 15
      %v450 = vpop.permute.xlu0 %449
      %vm451 = vcmp.lt.s32.totalorder %v172, 15
      %v452 = vsel %vm451, %v448, %v450
      %v453 = vsel %vm451, %v450, %v448
      %v454 = vsel %vm184, 1, 0
      %v455 = vsel %vm185, 1, 0
      %vm456 = vcmp.eq.s32.totalorder %v454, 1
      %vm457 = vcmp.eq.s32.totalorder %v455, 1
      %v458 = vsel %vm456, %v453, 0.0
      %v459 = vsel %vm457, %v452, 0.0
      %s460 = scalar_lea.vmem %s1, 64
      %v461 = vld [vmem:[%s460] sm:$0xff]
      %v462 = vld [vmem:[%s460 + $0x8] sm:$0xff]
      %v463 = vld [vmem:[%s460 + $0x10] sm:$0xff]
      %v464 = vld [vmem:[%s460 + $0x18] sm:$0xff]
      %v466 = vsel %vm231, %v461, 0
      %v469 = vsel %vm231, %v462, 0
      %v472 = vsel %vm231, %v463, 0
      %v475 = vsel %vm231, %v464, 0
      %v478 = vsel %vm244, %v458, 0
      %v481 = vsel %vm244, %v459, 0
      %483 = vmatprep.subr.mxu0 %v481
      %484 = vmatpush1.msra.mxu0 %v478
      %485 = vmatprep.subr.mxu0 0.0
      %486 = vmatpush1.msra.mxu0 0.0
      %487 = vmatprep.subr.mxu0 0.0
      %488 = vmatpush1.msra.mxu0 0.0
      %489 = vmatprep.subr.mxu0 0.0
      %490 = vmatpush1.msra.mxu0 0.0
      %491 = vmatprep.subr.mxu0 0.0
      %492 = vmatpush1.msra.mxu0 0.0
      %493 = vmatprep.subr.mxu0 0.0
      %494 = vmatpush1.msra.mxu0 0.0
      %495 = vmatprep.subr.mxu0 0.0
      %496 = vmatpush1.msra.mxu0 0.0
      %497 = vmatprep.subr.mxu0 0.0
      %498 = vmatpush1.msra.mxu0 0.0
      %499 = vmatprep.subr.mxu0 0.0
      %500 = vmatpush1.msra.mxu0 0.0
      %501 = vmatprep.subr.mxu0 0.0
      %502 = vmatpush1.msra.mxu0 0.0
      %503 = vmatprep.subr.mxu0 0.0
      %504 = vmatpush1.msra.mxu0 0.0
      %505 = vmatprep.subr.mxu0 0.0
      %506 = vmatpush1.msra.mxu0 0.0
      %507 = vmatprep.subr.mxu0 0.0
      %508 = vmatpush1.msra.mxu0 0.0
      %509 = vmatprep.subr.mxu0 0.0
      %510 = vmatpush1.msra.mxu0 0.0
      %511 = vmatprep.subr.mxu0 0.0
      %512 = vmatpush1.msra.mxu0 0.0
      %513 = vmatprep.subr.mxu0 0.0
      %514 = vmatpush1.msra.mxu0 0.0
      %515 = vmatprep.subr.mxu0 0.0
      %516 = vmatpush1.msra.mxu0 0.0
      %517 = vmatprep.subr.mxu0 0.0
      %518 = vmatpush1.msra.mxu0 0.0
      %519 = vmatprep.subr.mxu0 0.0
      %520 = vmatpush1.msra.mxu0 0.0
      %521 = vmatprep.subr.mxu0 0.0
      %522 = vmatpush1.msra.mxu0 0.0
      %523 = vmatprep.subr.mxu0 0.0
      %524 = vmatpush1.msra.mxu0 0.0
      %525 = vmatprep.subr.mxu0 0.0
      %526 = vmatpush1.msra.mxu0 0.0
      %527 = vmatprep.subr.mxu0 0.0
      %528 = vmatpush1.msra.mxu0 0.0
      %529 = vmatprep.subr.mxu0 0.0
      %530 = vmatpush1.msra.mxu0 0.0
      %531 = vmatprep.subr.mxu0 0.0
      %532 = vmatpush1.msra.mxu0 0.0
      %533 = vmatprep.subr.mxu0 0.0
      %534 = vmatpush1.msra.mxu0 0.0
      %535 = vmatprep.subr.mxu0 0.0
      %536 = vmatpush1.msra.mxu0 0.0
      %537 = vmatprep.subr.mxu0 0.0
      %538 = vmatpush1.msra.mxu0 0.0
      %539 = vmatprep.subr.mxu0 0.0
      %540 = vmatpush1.msra.mxu0 0.0
      %541 = vmatprep.subr.mxu0 0.0
      %542 = vmatpush1.msra.mxu0 0.0
      %543 = vmatprep.subr.mxu0 0.0
      %544 = vmatpush1.msra.mxu0 0.0
      %545 = vmatprep.subr.mxu0 0.0
      %546 = vmatpush1.msra.mxu0 0.0
      %547 = vmatprep.mubr.f32.mxu0 0.0
      %548 = vmatmul.mubr.f32.gmra.mrb[0].mxu0 %v466
      %v549 = vpop.f32.mrb[0].mxu0
      %v550 = vadd.f32 0.0, %v549
      %v551 = vpop.f32.mrb[0].mxu0
      %v552 = vadd.f32 0.0, %v551
      %553 = vmatprep.mubr.f32.mxu0 0.0
      %554 = vmatmul.mubr.f32.gmra.mrb[0].mxu0 %v469
      %v555 = vpop.f32.mrb[0].mxu0
      %v556 = vadd.f32 0.0, %v555
      %v557 = vpop.f32.mrb[0].mxu0
      %v558 = vadd.f32 0.0, %v557
      %559 = vmatprep.mubr.f32.mxu0 0.0
      %560 = vmatmul.mubr.f32.gmra.mrb[0].mxu0 %v472
      %v561 = vpop.f32.mrb[0].mxu0
      %v562 = vadd.f32 0.0, %v561
      %v563 = vpop.f32.mrb[0].mxu0
      %v564 = vadd.f32 0.0, %v563
      %565 = vmatprep.mubr.f32.mxu0 0.0
      %566 = vmatmul.mubr.f32.gmra.mrb[0].mxu0 %v475
      %v567 = vpop.f32.mrb[0].mxu0
      %v568 = vadd.f32 0.0, %v567
      %v569 = vpop.f32.mrb[0].mxu0
      %v570 = vadd.f32 0.0, %v569
      %571 = vdwg.mxu0
      %v572 = vadd.f32 %v425, %v550
      %v573 = vadd.f32 %v427, %v552
      %v574 = vadd.f32 %v431, %v556
      %v575 = vadd.f32 %v433, %v558
      %v576 = vadd.f32 %v437, %v562
      %v577 = vadd.f32 %v439, %v564
      %v578 = vadd.f32 %v443, %v568
      %v579 = vadd.f32 %v445, %v570
      %580 = vrot.lane.b32.xlu0 %v192, 1
      %v581 = vpop.permute.xlu0 %580
      %582 = vrot.lane.b32.xlu0 %v194, 1
      %v583 = vpop.permute.xlu0 %582
      %vm584 = vcmp.lt.s32.totalorder %v172, 1
      %v585 = vsel %vm584, %v581, %v583
      %v586 = vsel %vm584, %v583, %v581
      %v587 = vsel %vm178, 1, 0
      %v588 = vsel %vm179, 1, 0
      %vm589 = vcmp.eq.s32.totalorder %v587, 1
      %vm590 = vcmp.eq.s32.totalorder %v588, 1
      %v591 = vsel %vm589, %v586, 0.0
      %v592 = vsel %vm590, %v585, 0.0
      %s593 = scalar_lea.vmem %s1, 96
      %v594 = vld [vmem:[%s593] sm:$0xff]
      %v595 = vld [vmem:[%s593 + $0x8] sm:$0xff]
      %v596 = vld [vmem:[%s593 + $0x10] sm:$0xff]
      %v597 = vld [vmem:[%s593 + $0x18] sm:$0xff]
      %v599 = vsel %vm231, %v594, 0
      %v602 = vsel %vm231, %v595, 0
      %v605 = vsel %vm231, %v596, 0
      %v608 = vsel %vm231, %v597, 0
      %v611 = vsel %vm244, %v591, 0
      %v614 = vsel %vm244, %v592, 0
      %616 = vmatprep.subr.mxu0 %v614
      %617 = vmatpush1.msra.mxu0 %v611
      %618 = vmatprep.subr.mxu0 0.0
      %619 = vmatpush1.msra.mxu0 0.0
      %620 = vmatprep.subr.mxu0 0.0
      %621 = vmatpush1.msra.mxu0 0.0
      %622 = vmatprep.subr.mxu0 0.0
      %623 = vmatpush1.msra.mxu0 0.0
      %624 = vmatprep.subr.mxu0 0.0
      %625 = vmatpush1.msra.mxu0 0.0
      %626 = vmatprep.subr.mxu0 0.0
      %627 = vmatpush1.msra.mxu0 0.0
      %628 = vmatprep.subr.mxu0 0.0
      %629 = vmatpush1.msra.mxu0 0.0
      %630 = vmatprep.subr.mxu0 0.0
      %631 = vmatpush1.msra.mxu0 0.0
      %632 = vmatprep.subr.mxu0 0.0
      %633 = vmatpush1.msra.mxu0 0.0
      %634 = vmatprep.subr.mxu0 0.0
      %635 = vmatpush1.msra.mxu0 0.0
      %636 = vmatprep.subr.mxu0 0.0
      %637 = vmatpush1.msra.mxu0 0.0
      %638 = vmatprep.subr.mxu0 0.0
      %639 = vmatpush1.msra.mxu0 0.0
      %640 = vmatprep.subr.mxu0 0.0
      %641 = vmatpush1.msra.mxu0 0.0
      %642 = vmatprep.subr.mxu0 0.0
      %643 = vmatpush1.msra.mxu0 0.0
      %644 = vmatprep.subr.mxu0 0.0
      %645 = vmatpush1.msra.mxu0 0.0
      %646 = vmatprep.subr.mxu0 0.0
      %647 = vmatpush1.msra.mxu0 0.0
      %648 = vmatprep.subr.mxu0 0.0
      %649 = vmatpush1.msra.mxu0 0.0
      %650 = vmatprep.subr.mxu0 0.0
      %651 = vmatpush1.msra.mxu0 0.0
      %652 = vmatprep.subr.mxu0 0.0
      %653 = vmatpush1.msra.mxu0 0.0
      %654 = vmatprep.subr.mxu0 0.0
      %655 = vmatpush1.msra.mxu0 0.0
      %656 = vmatprep.subr.mxu0 0.0
      %657 = vmatpush1.msra.mxu0 0.0
      %658 = vmatprep.subr.mxu0 0.0
      %659 = vmatpush1.msra.mxu0 0.0
      %660 = vmatprep.subr.mxu0 0.0
      %661 = vmatpush1.msra.mxu0 0.0
      %662 = vmatprep.subr.mxu0 0.0
      %663 = vmatpush1.msra.mxu0 0.0
      %664 = vmatprep.subr.mxu0 0.0
      %665 = vmatpush1.msra.mxu0 0.0
      %666 = vmatprep.subr.mxu0 0.0
      %667 = vmatpush1.msra.mxu0 0.0
      %668 = vmatprep.subr.mxu0 0.0
      %669 = vmatpush1.msra.mxu0 0.0
      %670 = vmatprep.subr.mxu0 0.0
      %671 = vmatpush1.msra.mxu0 0.0
      %672 = vmatprep.subr.mxu0 0.0
      %673 = vmatpush1.msra.mxu0 0.0
      %674 = vmatprep.subr.mxu0 0.0
      %675 = vmatpush1.msra.mxu0 0.0
      %676 = vmatprep.subr.mxu0 0.0
      %677 = vmatpush1.msra.mxu0 0.0
      %678 = vmatprep.subr.mxu0 0.0
      %679 = vmatpush1.msra.mxu0 0.0
      %680 = vmatprep.mubr.f32.mxu0 0.0
      %681 = vmatmul.mubr.f32.gmra.mrb[0].mxu0 %v599
      %v682 = vpop.f32.mrb[0].mxu0
      %v683 = vadd.f32 0.0, %v682
      %v684 = vpop.f32.mrb[0].mxu0
      %v685 = vadd.f32 0.0, %v684
      %686 = vmatprep.mubr.f32.mxu0 0.0
      %687 = vmatmul.mubr.f32.gmra.mrb[0].mxu0 %v602
      %v688 = vpop.f32.mrb[0].mxu0
      %v689 = vadd.f32 0.0, %v688
      %v690 = vpop.f32.mrb[0].mxu0
      %v691 = vadd.f32 0.0, %v690
      %692 = vmatprep.mubr.f32.mxu0 0.0
      %693 = vmatmul.mubr.f32.gmra.mrb[0].mxu0 %v605
      %v694 = vpop.f32.mrb[0].mxu0
      %v695 = vadd.f32 0.0, %v694
      %v696 = vpop.f32.mrb[0].mxu0
      %v697 = vadd.f32 0.0, %v696
      %698 = vmatprep.mubr.f32.mxu0 0.0
      %699 = vmatmul.mubr.f32.gmra.mrb[0].mxu0 %v608
      %v700 = vpop.f32.mrb[0].mxu0
      %v701 = vadd.f32 0.0, %v700
      %v702 = vpop.f32.mrb[0].mxu0
      %v703 = vadd.f32 0.0, %v702
      %704 = vdwg.mxu0
      %v705 = vadd.f32 %v572, %v683
      %v706 = vadd.f32 %v573, %v685
      %v707 = vadd.f32 %v574, %v689
      %v708 = vadd.f32 %v575, %v691
      %v709 = vadd.f32 %v576, %v695
      %v710 = vadd.f32 %v577, %v697
      %v711 = vadd.f32 %v578, %v701
      %v712 = vadd.f32 %v579, %v703
      %s713 = scalar_lea.vmem %s1, 128
      %v714 = vld [vmem:[%s713] sm:$0xff]
      %v715 = vld [vmem:[%s713 + $0x8] sm:$0xff]
      %v716 = vld [vmem:[%s713 + $0x10] sm:$0xff]
      %v717 = vld [vmem:[%s713 + $0x18] sm:$0xff]
      %v719 = vsel %vm231, %v714, 0
      %v722 = vsel %vm231, %v715, 0
      %v725 = vsel %vm231, %v716, 0
      %v728 = vsel %vm231, %v717, 0
      %v730 = vsel %vm244, %v192, 0
      %v732 = vsel %vm244, %v194, 0
      %734 = vmatprep.subr.mxu0 %v732
      %735 = vmatpush1.msra.mxu0 %v730
      %736 = vmatprep.subr.mxu0 0.0
      %737 = vmatpush1.msra.mxu0 0.0
      %738 = vmatprep.subr.mxu0 0.0
      %739 = vmatpush1.msra.mxu0 0.0
      %740 = vmatprep.subr.mxu0 0.0
      %741 = vmatpush1.msra.mxu0 0.0
      %742 = vmatprep.subr.mxu0 0.0
      %743 = vmatpush1.msra.mxu0 0.0
      %744 = vmatprep.subr.mxu0 0.0
      %745 = vmatpush1.msra.mxu0 0.0
      %746 = vmatprep.subr.mxu0 0.0
      %747 = vmatpush1.msra.mxu0 0.0
      %748 = vmatprep.subr.mxu0 0.0
      %749 = vmatpush1.msra.mxu0 0.0
      %750 = vmatprep.subr.mxu0 0.0
      %751 = vmatpush1.msra.mxu0 0.0
      %752 = vmatprep.subr.mxu0 0.0
      %753 = vmatpush1.msra.mxu0 0.0
      %754 = vmatprep.subr.mxu0 0.0
      %755 = vmatpush1.msra.mxu0 0.0
      %756 = vmatprep.subr.mxu0 0.0
      %757 = vmatpush1.msra.mxu0 0.0
      %758 = vmatprep.subr.mxu0 0.0
      %759 = vmatpush1.msra.mxu0 0.0
      %760 = vmatprep.subr.mxu0 0.0
      %761 = vmatpush1.msra.mxu0 0.0
      %762 = vmatprep.subr.mxu0 0.0
      %763 = vmatpush1.msra.mxu0 0.0
      %764 = vmatprep.subr.mxu0 0.0
      %765 = vmatpush1.msra.mxu0 0.0
      %766 = vmatprep.subr.mxu0 0.0
      %767 = vmatpush1.msra.mxu0 0.0
      %768 = vmatprep.subr.mxu0 0.0
      %769 = vmatpush1.msra.mxu0 0.0
      %770 = vmatprep.subr.mxu0 0.0
      %771 = vmatpush1.msra.mxu0 0.0
      %772 = vmatprep.subr.mxu0 0.0
      %773 = vmatpush1.msra.mxu0 0.0
      %774 = vmatprep.subr.mxu0 0.0
      %775 = vmatpush1.msra.mxu0 0.0
      %776 = vmatprep.subr.mxu0 0.0
      %777 = vmatpush1.msra.mxu0 0.0
      %778 = vmatprep.subr.mxu0 0.0
      %779 = vmatpush1.msra.mxu0 0.0
      %780 = vmatprep.subr.mxu0 0.0
      %781 = vmatpush1.msra.mxu0 0.0
      %782 = vmatprep.subr.mxu0 0.0
      %783 = vmatpush1.msra.mxu0 0.0
      %784 = vmatprep.subr.mxu0 0.0
      %785 = vmatpush1.msra.mxu0 0.0
      %786 = vmatprep.subr.mxu0 0.0
      %787 = vmatpush1.msra.mxu0 0.0
      %788 = vmatprep.subr.mxu0 0.0
      %789 = vmatpush1.msra.mxu0 0.0
      %790 = vmatprep.subr.mxu0 0.0
      %791 = vmatpush1.msra.mxu0 0.0
      %792 = vmatprep.subr.mxu0 0.0
      %793 = vmatpush1.msra.mxu0 0.0
      %794 = vmatprep.subr.mxu0 0.0
      %795 = vmatpush1.msra.mxu0 0.0
      %796 = vmatprep.subr.mxu0 0.0
      %797 = vmatpush1.msra.mxu0 0.0
      %798 = vmatprep.mubr.f32.mxu0 0.0
      %799 = vmatmul.mubr.f32.gmra.mrb[0].mxu0 %v719
      %v800 = vpop.f32.mrb[0].mxu0
      %v801 = vadd.f32 0.0, %v800
      %v802 = vpop.f32.mrb[0].mxu0
      %v803 = vadd.f32 0.0, %v802
      %804 = vmatprep.mubr.f32.mxu0 0.0
      %805 = vmatmul.mubr.f32.gmra.mrb[0].mxu0 %v722
      %v806 = vpop.f32.mrb[0].mxu0
      %v807 = vadd.f32 0.0, %v806
      %v808 = vpop.f32.mrb[0].mxu0
      %v809 = vadd.f32 0.0, %v808
      %810 = vmatprep.mubr.f32.mxu0 0.0
      %811 = vmatmul.mubr.f32.gmra.mrb[0].mxu0 %v725
      %v812 = vpop.f32.mrb[0].mxu0
      %v813 = vadd.f32 0.0, %v812
      %v814 = vpop.f32.mrb[0].mxu0
      %v815 = vadd.f32 0.0, %v814
      %816 = vmatprep.mubr.f32.mxu0 0.0
      %817 = vmatmul.mubr.f32.gmra.mrb[0].mxu0 %v728
      %v818 = vpop.f32.mrb[0].mxu0
      %v819 = vadd.f32 0.0, %v818
      %v820 = vpop.f32.mrb[0].mxu0
      %v821 = vadd.f32 0.0, %v820
      %822 = vdwg.mxu0
      %v823 = vadd.f32 %v705, %v801
      %v824 = vadd.f32 %v706, %v803
      %v825 = vadd.f32 %v707, %v807
      %v826 = vadd.f32 %v708, %v809
      %v827 = vadd.f32 %v709, %v813
      %v828 = vadd.f32 %v710, %v815
      %v829 = vadd.f32 %v711, %v819
      %v830 = vadd.f32 %v712, %v821
      %831 = vrot.lane.b32.xlu0 %v192, 127
      %v832 = vpop.permute.xlu0 %831
      %833 = vrot.lane.b32.xlu0 %v194, 127
      %v834 = vpop.permute.xlu0 %833
      %vm835 = vcmp.lt.s32.totalorder %v172, 127
      %v836 = vsel %vm835, %v832, %v834
      %v837 = vsel %vm835, %v834, %v832
      %v838 = vsel %vm182, 1, 0
      %v839 = vsel %vm183, 1, 0
      %vm840 = vcmp.eq.s32.totalorder %v838, 1
      %vm841 = vcmp.eq.s32.totalorder %v839, 1
      %v842 = vsel %vm840, %v836, 0.0
      %v843 = vsel %vm841, %v837, 0.0
      %s844 = scalar_lea.vmem %s1, 160
      %v845 = vld [vmem:[%s844] sm:$0xff]
      %v846 = vld [vmem:[%s844 + $0x8] sm:$0xff]
      %v847 = vld [vmem:[%s844 + $0x10] sm:$0xff]
      %v848 = vld [vmem:[%s844 + $0x18] sm:$0xff]
      %v850 = vsel %vm231, %v845, 0
      %v853 = vsel %vm231, %v846, 0
      %v856 = vsel %vm231, %v847, 0
      %v859 = vsel %vm231, %v848, 0
      %v862 = vsel %vm244, %v842, 0
      %v865 = vsel %vm244, %v843, 0
      %867 = vmatprep.subr.mxu0 %v865
      %868 = vmatpush1.msra.mxu0 %v862
      %869 = vmatprep.subr.mxu0 0.0
      %870 = vmatpush1.msra.mxu0 0.0
      %871 = vmatprep.subr.mxu0 0.0
      %872 = vmatpush1.msra.mxu0 0.0
      %873 = vmatprep.subr.mxu0 0.0
      %874 = vmatpush1.msra.mxu0 0.0
      %875 = vmatprep.subr.mxu0 0.0
      %876 = vmatpush1.msra.mxu0 0.0
      %877 = vmatprep.subr.mxu0 0.0
      %878 = vmatpush1.msra.mxu0 0.0
      %879 = vmatprep.subr.mxu0 0.0
      %880 = vmatpush1.msra.mxu0 0.0
      %881 = vmatprep.subr.mxu0 0.0
      %882 = vmatpush1.msra.mxu0 0.0
      %883 = vmatprep.subr.mxu0 0.0
      %884 = vmatpush1.msra.mxu0 0.0
      %885 = vmatprep.subr.mxu0 0.0
      %886 = vmatpush1.msra.mxu0 0.0
      %887 = vmatprep.subr.mxu0 0.0
      %888 = vmatpush1.msra.mxu0 0.0
      %889 = vmatprep.subr.mxu0 0.0
      %890 = vmatpush1.msra.mxu0 0.0
      %891 = vmatprep.subr.mxu0 0.0
      %892 = vmatpush1.msra.mxu0 0.0
      %893 = vmatprep.subr.mxu0 0.0
      %894 = vmatpush1.msra.mxu0 0.0
      %895 = vmatprep.subr.mxu0 0.0
      %896 = vmatpush1.msra.mxu0 0.0
      %897 = vmatprep.subr.mxu0 0.0
      %898 = vmatpush1.msra.mxu0 0.0
      %899 = vmatprep.subr.mxu0 0.0
      %900 = vmatpush1.msra.mxu0 0.0
      %901 = vmatprep.subr.mxu0 0.0
      %902 = vmatpush1.msra.mxu0 0.0
      %903 = vmatprep.subr.mxu0 0.0
      %904 = vmatpush1.msra.mxu0 0.0
      %905 = vmatprep.subr.mxu0 0.0
      %906 = vmatpush1.msra.mxu0 0.0
      %907 = vmatprep.subr.mxu0 0.0
      %908 = vmatpush1.msra.mxu0 0.0
      %909 = vmatprep.subr.mxu0 0.0
      %910 = vmatpush1.msra.mxu0 0.0
      %911 = vmatprep.subr.mxu0 0.0
      %912 = vmatpush1.msra.mxu0 0.0
      %913 = vmatprep.subr.mxu0 0.0
      %914 = vmatpush1.msra.mxu0 0.0
      %915 = vmatprep.subr.mxu0 0.0
      %916 = vmatpush1.msra.mxu0 0.0
      %917 = vmatprep.subr.mxu0 0.0
      %918 = vmatpush1.msra.mxu0 0.0
      %919 = vmatprep.subr.mxu0 0.0
      %920 = vmatpush1.msra.mxu0 0.0
      %921 = vmatprep.subr.mxu0 0.0
      %922 = vmatpush1.msra.mxu0 0.0
      %923 = vmatprep.subr.mxu0 0.0
      %924 = vmatpush1.msra.mxu0 0.0
      %925 = vmatprep.subr.mxu0 0.0
      %926 = vmatpush1.msra.mxu0 0.0
      %927 = vmatprep.subr.mxu0 0.0
      %928 = vmatpush1.msra.mxu0 0.0
      %929 = vmatprep.subr.mxu0 0.0
      %930 = vmatpush1.msra.mxu0 0.0
      %931 = vmatprep.mubr.f32.mxu0 0.0
      %932 = vmatmul.mubr.f32.gmra.mrb[0].mxu0 %v850
      %v933 = vpop.f32.mrb[0].mxu0
      %v934 = vadd.f32 0.0, %v933
      %v935 = vpop.f32.mrb[0].mxu0
      %v936 = vadd.f32 0.0, %v935
      %937 = vmatprep.mubr.f32.mxu0 0.0
      %938 = vmatmul.mubr.f32.gmra.mrb[0].mxu0 %v853
      %v939 = vpop.f32.mrb[0].mxu0
      %v940 = vadd.f32 0.0, %v939
      %v941 = vpop.f32.mrb[0].mxu0
      %v942 = vadd.f32 0.0, %v941
      %943 = vmatprep.mubr.f32.mxu0 0.0
      %944 = vmatmul.mubr.f32.gmra.mrb[0].mxu0 %v856
      %v945 = vpop.f32.mrb[0].mxu0
      %v946 = vadd.f32 0.0, %v945
      %v947 = vpop.f32.mrb[0].mxu0
      %v948 = vadd.f32 0.0, %v947
      %949 = vmatprep.mubr.f32.mxu0 0.0
      %950 = vmatmul.mubr.f32.gmra.mrb[0].mxu0 %v859
      %v951 = vpop.f32.mrb[0].mxu0
      %v952 = vadd.f32 0.0, %v951
      %v953 = vpop.f32.mrb[0].mxu0
      %v954 = vadd.f32 0.0, %v953
      %955 = vdwg.mxu0
      %v956 = vadd.f32 %v823, %v934
      %v957 = vadd.f32 %v824, %v936
      %v958 = vadd.f32 %v825, %v940
      %v959 = vadd.f32 %v826, %v942
      %v960 = vadd.f32 %v827, %v946
      %v961 = vadd.f32 %v828, %v948
      %v962 = vadd.f32 %v829, %v952
      %v963 = vadd.f32 %v830, %v954
      %964 = vrot.lane.b32.xlu0 %v192, 113
      %v965 = vpop.permute.xlu0 %964
      %966 = vrot.lane.b32.xlu0 %v194, 113
      %v967 = vpop.permute.xlu0 %966
      %vm968 = vcmp.lt.s32.totalorder %v172, 113
      %v969 = vsel %vm968, %v965, %v967
      %v970 = vsel %vm968, %v967, %v965
      %v971 = vsel %vm188, 1, 0
      %v972 = vsel %vm189, 1, 0
      %vm973 = vcmp.eq.s32.totalorder %v971, 1
      %vm974 = vcmp.eq.s32.totalorder %v972, 1
      %v975 = vsel %vm973, %v969, 0.0
      %v976 = vsel %vm974, %v970, 0.0
      %s977 = scalar_lea.vmem %s1, 192
      %v978 = vld [vmem:[%s977] sm:$0xff]
      %v979 = vld [vmem:[%s977 + $0x8] sm:$0xff]
      %v980 = vld [vmem:[%s977 + $0x10] sm:$0xff]
      %v981 = vld [vmem:[%s977 + $0x18] sm:$0xff]
      %v983 = vsel %vm231, %v978, 0
      %v986 = vsel %vm231, %v979, 0
      %v989 = vsel %vm231, %v980, 0
      %v992 = vsel %vm231, %v981, 0
      %v995 = vsel %vm244, %v975, 0
      %v998 = vsel %vm244, %v976, 0
      %1000 = vmatprep.subr.mxu0 %v998
      %1001 = vmatpush1.msra.mxu0 %v995
      %1002 = vmatprep.subr.mxu0 0.0
      %1003 = vmatpush1.msra.mxu0 0.0
      %1004 = vmatprep.subr.mxu0 0.0
      %1005 = vmatpush1.msra.mxu0 0.0
      %1006 = vmatprep.subr.mxu0 0.0
      %1007 = vmatpush1.msra.mxu0 0.0
      %1008 = vmatprep.subr.mxu0 0.0
      %1009 = vmatpush1.msra.mxu0 0.0
      %1010 = vmatprep.subr.mxu0 0.0
      %1011 = vmatpush1.msra.mxu0 0.0
      %1012 = vmatprep.subr.mxu0 0.0
      %1013 = vmatpush1.msra.mxu0 0.0
      %1014 = vmatprep.subr.mxu0 0.0
      %1015 = vmatpush1.msra.mxu0 0.0
      %1016 = vmatprep.subr.mxu0 0.0
      %1017 = vmatpush1.msra.mxu0 0.0
      %1018 = vmatprep.subr.mxu0 0.0
      %1019 = vmatpush1.msra.mxu0 0.0
      %1020 = vmatprep.subr.mxu0 0.0
      %1021 = vmatpush1.msra.mxu0 0.0
      %1022 = vmatprep.subr.mxu0 0.0
      %1023 = vmatpush1.msra.mxu0 0.0
      %1024 = vmatprep.subr.mxu0 0.0
      %1025 = vmatpush1.msra.mxu0 0.0
      %1026 = vmatprep.subr.mxu0 0.0
      %1027 = vmatpush1.msra.mxu0 0.0
      %1028 = vmatprep.subr.mxu0 0.0
      %1029 = vmatpush1.msra.mxu0 0.0
      %1030 = vmatprep.subr.mxu0 0.0
      %1031 = vmatpush1.msra.mxu0 0.0
      %1032 = vmatprep.subr.mxu0 0.0
      %1033 = vmatpush1.msra.mxu0 0.0
      %1034 = vmatprep.subr.mxu0 0.0
      %1035 = vmatpush1.msra.mxu0 0.0
      %1036 = vmatprep.subr.mxu0 0.0
      %1037 = vmatpush1.msra.mxu0 0.0
      %1038 = vmatprep.subr.mxu0 0.0
      %1039 = vmatpush1.msra.mxu0 0.0
      %1040 = vmatprep.subr.mxu0 0.0
      %1041 = vmatpush1.msra.mxu0 0.0
      %1042 = vmatprep.subr.mxu0 0.0
      %1043 = vmatpush1.msra.mxu0 0.0
      %1044 = vmatprep.subr.mxu0 0.0
      %1045 = vmatpush1.msra.mxu0 0.0
      %1046 = vmatprep.subr.mxu0 0.0
      %1047 = vmatpush1.msra.mxu0 0.0
      %1048 = vmatprep.subr.mxu0 0.0
      %1049 = vmatpush1.msra.mxu0 0.0
      %1050 = vmatprep.subr.mxu0 0.0
      %1051 = vmatpush1.msra.mxu0 0.0
      %1052 = vmatprep.subr.mxu0 0.0
      %1053 = vmatpush1.msra.mxu0 0.0
      %1054 = vmatprep.subr.mxu0 0.0
      %1055 = vmatpush1.msra.mxu0 0.0
      %1056 = vmatprep.subr.mxu0 0.0
      %1057 = vmatpush1.msra.mxu0 0.0
      %1058 = vmatprep.subr.mxu0 0.0
      %1059 = vmatpush1.msra.mxu0 0.0
      %1060 = vmatprep.subr.mxu0 0.0
      %1061 = vmatpush1.msra.mxu0 0.0
      %1062 = vmatprep.subr.mxu0 0.0
      %1063 = vmatpush1.msra.mxu0 0.0
      %1064 = vmatprep.mubr.f32.mxu0 0.0
      %1065 = vmatmul.mubr.f32.gmra.mrb[0].mxu0 %v983
      %v1066 = vpop.f32.mrb[0].mxu0
      %v1067 = vadd.f32 0.0, %v1066
      %v1068 = vpop.f32.mrb[0].mxu0
      %v1069 = vadd.f32 0.0, %v1068
      %1070 = vmatprep.mubr.f32.mxu0 0.0
      %1071 = vmatmul.mubr.f32.gmra.mrb[0].mxu0 %v986
      %v1072 = vpop.f32.mrb[0].mxu0
      %v1073 = vadd.f32 0.0, %v1072
      %v1074 = vpop.f32.mrb[0].mxu0
      %v1075 = vadd.f32 0.0, %v1074
      %1076 = vmatprep.mubr.f32.mxu0 0.0
      %1077 = vmatmul.mubr.f32.gmra.mrb[0].mxu0 %v989
      %v1078 = vpop.f32.mrb[0].mxu0
      %v1079 = vadd.f32 0.0, %v1078
      %v1080 = vpop.f32.mrb[0].mxu0
      %v1081 = vadd.f32 0.0, %v1080
      %1082 = vmatprep.mubr.f32.mxu0 0.0
      %1083 = vmatmul.mubr.f32.gmra.mrb[0].mxu0 %v992
      %v1084 = vpop.f32.mrb[0].mxu0
      %v1085 = vadd.f32 0.0, %v1084
      %v1086 = vpop.f32.mrb[0].mxu0
      %v1087 = vadd.f32 0.0, %v1086
      %1088 = vdwg.mxu0
      %v1089 = vadd.f32 %v956, %v1067
      %v1090 = vadd.f32 %v957, %v1069
      %v1091 = vadd.f32 %v958, %v1073
      %v1092 = vadd.f32 %v959, %v1075
      %v1093 = vadd.f32 %v960, %v1079
      %v1094 = vadd.f32 %v961, %v1081
      %v1095 = vadd.f32 %v962, %v1085
      %v1096 = vadd.f32 %v963, %v1087
      %1097 = vrot.lane.b32.xlu0 %v192, 112
      %v1098 = vpop.permute.xlu0 %1097
      %1099 = vrot.lane.b32.xlu0 %v194, 112
      %v1100 = vpop.permute.xlu0 %1099
      %vm1101 = vcmp.lt.s32.totalorder %v172, 112
      %v1102 = vsel %vm1101, %v1098, %v1100
      %v1103 = vsel %vm1101, %v1100, %v1098
      %v1104 = vsel %vm186, 1, 0
      %v1105 = vsel %vm187, 1, 0
      %vm1106 = vcmp.eq.s32.totalorder %v1104, 1
      %vm1107 = vcmp.eq.s32.totalorder %v1105, 1
      %v1108 = vsel %vm1106, %v1102, 0.0
      %v1109 = vsel %vm1107, %v1103, 0.0
      %s1110 = scalar_lea.vmem %s1, 224
      %v1111 = vld [vmem:[%s1110] sm:$0xff]
      %v1112 = vld [vmem:[%s1110 + $0x8] sm:$0xff]
      %v1113 = vld [vmem:[%s1110 + $0x10] sm:$0xff]
      %v1114 = vld [vmem:[%s1110 + $0x18] sm:$0xff]
      %v1116 = vsel %vm231, %v1111, 0
      %v1119 = vsel %vm231, %v1112, 0
      %v1122 = vsel %vm231, %v1113, 0
      %v1125 = vsel %vm231, %v1114, 0
      %v1128 = vsel %vm244, %v1108, 0
      %v1131 = vsel %vm244, %v1109, 0
      %1133 = vmatprep.subr.mxu0 %v1131
      %1134 = vmatpush1.msra.mxu0 %v1128
      %1135 = vmatprep.subr.mxu0 0.0
      %1136 = vmatpush1.msra.mxu0 0.0
      %1137 = vmatprep.subr.mxu0 0.0
      %1138 = vmatpush1.msra.mxu0 0.0
      %1139 = vmatprep.subr.mxu0 0.0
      %1140 = vmatpush1.msra.mxu0 0.0
      %1141 = vmatprep.subr.mxu0 0.0
      %1142 = vmatpush1.msra.mxu0 0.0
      %1143 = vmatprep.subr.mxu0 0.0
      %1144 = vmatpush1.msra.mxu0 0.0
      %1145 = vmatprep.subr.mxu0 0.0
      %1146 = vmatpush1.msra.mxu0 0.0
      %1147 = vmatprep.subr.mxu0 0.0
      %1148 = vmatpush1.msra.mxu0 0.0
      %1149 = vmatprep.subr.mxu0 0.0
      %1150 = vmatpush1.msra.mxu0 0.0
      %1151 = vmatprep.subr.mxu0 0.0
      %1152 = vmatpush1.msra.mxu0 0.0
      %1153 = vmatprep.subr.mxu0 0.0
      %1154 = vmatpush1.msra.mxu0 0.0
      %1155 = vmatprep.subr.mxu0 0.0
      %1156 = vmatpush1.msra.mxu0 0.0
      %1157 = vmatprep.subr.mxu0 0.0
      %1158 = vmatpush1.msra.mxu0 0.0
      %1159 = vmatprep.subr.mxu0 0.0
      %1160 = vmatpush1.msra.mxu0 0.0
      %1161 = vmatprep.subr.mxu0 0.0
      %1162 = vmatpush1.msra.mxu0 0.0
      %1163 = vmatprep.subr.mxu0 0.0
      %1164 = vmatpush1.msra.mxu0 0.0
      %1165 = vmatprep.subr.mxu0 0.0
      %1166 = vmatpush1.msra.mxu0 0.0
      %1167 = vmatprep.subr.mxu0 0.0
      %1168 = vmatpush1.msra.mxu0 0.0
      %1169 = vmatprep.subr.mxu0 0.0
      %1170 = vmatpush1.msra.mxu0 0.0
      %1171 = vmatprep.subr.mxu0 0.0
      %1172 = vmatpush1.msra.mxu0 0.0
      %1173 = vmatprep.subr.mxu0 0.0
      %1174 = vmatpush1.msra.mxu0 0.0
      %1175 = vmatprep.subr.mxu0 0.0
      %1176 = vmatpush1.msra.mxu0 0.0
      %1177 = vmatprep.subr.mxu0 0.0
      %1178 = vmatpush1.msra.mxu0 0.0
      %1179 = vmatprep.subr.mxu0 0.0
      %1180 = vmatpush1.msra.mxu0 0.0
      %1181 = vmatprep.subr.mxu0 0.0
      %1182 = vmatpush1.msra.mxu0 0.0
      %1183 = vmatprep.subr.mxu0 0.0
      %1184 = vmatpush1.msra.mxu0 0.0
      %1185 = vmatprep.subr.mxu0 0.0
      %1186 = vmatpush1.msra.mxu0 0.0
      %1187 = vmatprep.subr.mxu0 0.0
      %1188 = vmatpush1.msra.mxu0 0.0
      %1189 = vmatprep.subr.mxu0 0.0
      %1190 = vmatpush1.msra.mxu0 0.0
      %1191 = vmatprep.subr.mxu0 0.0
      %1192 = vmatpush1.msra.mxu0 0.0
      %1193 = vmatprep.subr.mxu0 0.0
      %1194 = vmatpush1.msra.mxu0 0.0
      %1195 = vmatprep.subr.mxu0 0.0
      %1196 = vmatpush1.msra.mxu0 0.0
      %1197 = vmatprep.mubr.f32.mxu0 0.0
      %1198 = vmatmul.mubr.f32.gmra.mrb[0].mxu0 %v1116
      %v1199 = vpop.f32.mrb[0].mxu0
      %v1200 = vadd.f32 0.0, %v1199
      %v1201 = vpop.f32.mrb[0].mxu0
      %v1202 = vadd.f32 0.0, %v1201
      %1203 = vmatprep.mubr.f32.mxu0 0.0
      %1204 = vmatmul.mubr.f32.gmra.mrb[0].mxu0 %v1119
      %v1205 = vpop.f32.mrb[0].mxu0
      %v1206 = vadd.f32 0.0, %v1205
      %v1207 = vpop.f32.mrb[0].mxu0
      %v1208 = vadd.f32 0.0, %v1207
      %1209 = vmatprep.mubr.f32.mxu0 0.0
      %1210 = vmatmul.mubr.f32.gmra.mrb[0].mxu0 %v1122
      %v1211 = vpop.f32.mrb[0].mxu0
      %v1212 = vadd.f32 0.0, %v1211
      %v1213 = vpop.f32.mrb[0].mxu0
      %v1214 = vadd.f32 0.0, %v1213
      %1215 = vmatprep.mubr.f32.mxu0 0.0
      %1216 = vmatmul.mubr.f32.gmra.mrb[0].mxu0 %v1125
      %v1217 = vpop.f32.mrb[0].mxu0
      %v1218 = vadd.f32 0.0, %v1217
      %v1219 = vpop.f32.mrb[0].mxu0
      %v1220 = vadd.f32 0.0, %v1219
      %1221 = vdwg.mxu0
      %v1222 = vadd.f32 %v1089, %v1200
      %v1223 = vadd.f32 %v1090, %v1202
      %v1224 = vadd.f32 %v1091, %v1206
      %v1225 = vadd.f32 %v1092, %v1208
      %v1226 = vadd.f32 %v1093, %v1212
      %v1227 = vadd.f32 %v1094, %v1214
      %v1228 = vadd.f32 %v1095, %v1218
      %v1229 = vadd.f32 %v1096, %v1220
      %1230 = vrot.lane.b32.xlu0 %v192, 111
      %v1231 = vpop.permute.xlu0 %1230
      %1232 = vrot.lane.b32.xlu0 %v194, 111
      %v1233 = vpop.permute.xlu0 %1232
      %vm1234 = vcmp.lt.s32.totalorder %v172, 111
      %v1235 = vsel %vm1234, %v1231, %v1233
      %v1236 = vsel %vm1234, %v1233, %v1231
      %v1237 = vsel %vm190, 1, 0
      %v1238 = vsel %vm191, 1, 0
      %vm1239 = vcmp.eq.s32.totalorder %v1237, 1
      %vm1240 = vcmp.eq.s32.totalorder %v1238, 1
      %v1241 = vsel %vm1239, %v1235, 0.0
      %v1242 = vsel %vm1240, %v1236, 0.0
      %s1243 = scalar_lea.vmem %s1, 256
      %v1244 = vld [vmem:[%s1243] sm:$0xff]
      %v1245 = vld [vmem:[%s1243 + $0x8] sm:$0xff]
      %v1246 = vld [vmem:[%s1243 + $0x10] sm:$0xff]
      %v1247 = vld [vmem:[%s1243 + $0x18] sm:$0xff]
      %v1249 = vsel %vm231, %v1244, 0
      %v1252 = vsel %vm231, %v1245, 0
      %v1255 = vsel %vm231, %v1246, 0
      %v1258 = vsel %vm231, %v1247, 0
      %v1261 = vsel %vm244, %v1241, 0
      %v1264 = vsel %vm244, %v1242, 0
      %1266 = vmatprep.subr.mxu0 %v1264
      %1267 = vmatpush1.msra.mxu0 %v1261
      %1268 = vmatprep.subr.mxu0 0.0
      %1269 = vmatpush1.msra.mxu0 0.0
      %1270 = vmatprep.subr.mxu0 0.0
      %1271 = vmatpush1.msra.mxu0 0.0
      %1272 = vmatprep.subr.mxu0 0.0
      %1273 = vmatpush1.msra.mxu0 0.0
      %1274 = vmatprep.subr.mxu0 0.0
      %1275 = vmatpush1.msra.mxu0 0.0
      %1276 = vmatprep.subr.mxu0 0.0
      %1277 = vmatpush1.msra.mxu0 0.0
      %1278 = vmatprep.subr.mxu0 0.0
      %1279 = vmatpush1.msra.mxu0 0.0
      %1280 = vmatprep.subr.mxu0 0.0
      %1281 = vmatpush1.msra.mxu0 0.0
      %1282 = vmatprep.subr.mxu0 0.0
      %1283 = vmatpush1.msra.mxu0 0.0
      %1284 = vmatprep.subr.mxu0 0.0
      %1285 = vmatpush1.msra.mxu0 0.0
      %1286 = vmatprep.subr.mxu0 0.0
      %1287 = vmatpush1.msra.mxu0 0.0
      %1288 = vmatprep.subr.mxu0 0.0
      %1289 = vmatpush1.msra.mxu0 0.0
      %1290 = vmatprep.subr.mxu0 0.0
      %1291 = vmatpush1.msra.mxu0 0.0
      %1292 = vmatprep.subr.mxu0 0.0
      %1293 = vmatpush1.msra.mxu0 0.0
      %1294 = vmatprep.subr.mxu0 0.0
      %1295 = vmatpush1.msra.mxu0 0.0
      %1296 = vmatprep.subr.mxu0 0.0
      %1297 = vmatpush1.msra.mxu0 0.0
      %1298 = vmatprep.subr.mxu0 0.0
      %1299 = vmatpush1.msra.mxu0 0.0
      %1300 = vmatprep.subr.mxu0 0.0
      %1301 = vmatpush1.msra.mxu0 0.0
      %1302 = vmatprep.subr.mxu0 0.0
      %1303 = vmatpush1.msra.mxu0 0.0
      %1304 = vmatprep.subr.mxu0 0.0
      %1305 = vmatpush1.msra.mxu0 0.0
      %1306 = vmatprep.subr.mxu0 0.0
      %1307 = vmatpush1.msra.mxu0 0.0
      %1308 = vmatprep.subr.mxu0 0.0
      %1309 = vmatpush1.msra.mxu0 0.0
      %1310 = vmatprep.subr.mxu0 0.0
      %1311 = vmatpush1.msra.mxu0 0.0
      %1312 = vmatprep.subr.mxu0 0.0
      %1313 = vmatpush1.msra.mxu0 0.0
      %1314 = vmatprep.subr.mxu0 0.0
      %1315 = vmatpush1.msra.mxu0 0.0
      %1316 = vmatprep.subr.mxu0 0.0
      %1317 = vmatpush1.msra.mxu0 0.0
      %1318 = vmatprep.subr.mxu0 0.0
      %1319 = vmatpush1.msra.mxu0 0.0
      %1320 = vmatprep.subr.mxu0 0.0
      %1321 = vmatpush1.msra.mxu0 0.0
      %1322 = vmatprep.subr.mxu0 0.0
      %1323 = vmatpush1.msra.mxu0 0.0
      %1324 = vmatprep.subr.mxu0 0.0
      %1325 = vmatpush1.msra.mxu0 0.0
      %1326 = vmatprep.subr.mxu0 0.0
      %1327 = vmatpush1.msra.mxu0 0.0
      %1328 = vmatprep.subr.mxu0 0.0
      %1329 = vmatpush1.msra.mxu0 0.0
      %1330 = vmatprep.mubr.f32.mxu0 0.0
      %1331 = vmatmul.mubr.f32.gmra.mrb[0].mxu0 %v1249
      %v1332 = vpop.f32.mrb[0].mxu0
      %v1333 = vadd.f32 0.0, %v1332
      %v1334 = vpop.f32.mrb[0].mxu0
      %v1335 = vadd.f32 0.0, %v1334
      %1336 = vmatprep.mubr.f32.mxu0 0.0
      %1337 = vmatmul.mubr.f32.gmra.mrb[0].mxu0 %v1252
      %v1338 = vpop.f32.mrb[0].mxu0
      %v1339 = vadd.f32 0.0, %v1338
      %v1340 = vpop.f32.mrb[0].mxu0
      %v1341 = vadd.f32 0.0, %v1340
      %1342 = vmatprep.mubr.f32.mxu0 0.0
      %1343 = vmatmul.mubr.f32.gmra.mrb[0].mxu0 %v1255
      %v1344 = vpop.f32.mrb[0].mxu0
      %v1345 = vadd.f32 0.0, %v1344
      %v1346 = vpop.f32.mrb[0].mxu0
      %v1347 = vadd.f32 0.0, %v1346
      %1348 = vmatprep.mubr.f32.mxu0 0.0
      %1349 = vmatmul.mubr.f32.gmra.mrb[0].mxu0 %v1258
      %v1350 = vpop.f32.mrb[0].mxu0
      %v1351 = vadd.f32 0.0, %v1350
      %v1352 = vpop.f32.mrb[0].mxu0
      %v1353 = vadd.f32 0.0, %v1352
      %1354 = vdwg.mxu0
      %v1355 = vadd.f32 %v1222, %v1333
      %v1356 = vadd.f32 %v1223, %v1335
      %v1357 = vadd.f32 %v1224, %v1339
      %v1358 = vadd.f32 %v1225, %v1341
      %v1359 = vadd.f32 %v1226, %v1345
      %v1360 = vadd.f32 %v1227, %v1347
      %v1361 = vadd.f32 %v1228, %v1351
      %v1362 = vadd.f32 %v1229, %v1353
      %v1363 = vmax.f32 %v1355, 0.0
      %v1364 = vmax.f32 %v1356, 0.0
      %v1365 = vmax.f32 %v1357, 0.0
      %v1366 = vmax.f32 %v1358, 0.0
      %v1367 = vmax.f32 %v1359, 0.0
      %v1368 = vmax.f32 %v1360, 0.0
      %v1369 = vmax.f32 %v1361, 0.0
      %v1370 = vmax.f32 %v1362, 0.0
      %1371 = vrot.lane.b32.xlu0 %v1363, 17
      %v1372 = vpop.permute.xlu0 %1371
      %1373 = vrot.lane.b32.xlu0 %v1365, 17
      %v1374 = vpop.permute.xlu0 %1373
      %1375 = vrot.lane.b32.xlu0 %v1367, 17
      %v1376 = vpop.permute.xlu0 %1375
      %1377 = vrot.lane.b32.xlu0 %v1369, 17
      %v1378 = vpop.permute.xlu0 %1377
      %1379 = vrot.lane.b32.xlu0 %v1364, 17
      %v1380 = vpop.permute.xlu0 %1379
      %1381 = vrot.lane.b32.xlu0 %v1366, 17
      %v1382 = vpop.permute.xlu0 %1381
      %1383 = vrot.lane.b32.xlu0 %v1368, 17
      %v1384 = vpop.permute.xlu0 %1383
      %1385 = vrot.lane.b32.xlu0 %v1370, 17
      %v1386 = vpop.permute.xlu0 %1385
      %v1387 = vsel %vm200, %v1372, %v1380
      %v1388 = vsel %vm200, %v1374, %v1382
      %v1389 = vsel %vm200, %v1376, %v1384
      %v1390 = vsel %vm200, %v1378, %v1386
      %v1391 = vsel %vm200, %v1380, %v1372
      %v1392 = vsel %vm200, %v1382, %v1374
      %v1393 = vsel %vm200, %v1384, %v1376
      %v1394 = vsel %vm200, %v1386, %v1378
      %v1395 = vsel %vm205, %v1391, 0.0
      %v1396 = vsel %vm206, %v1387, 0.0
      %v1397 = vsel %vm205, %v1392, 0.0
      %v1398 = vsel %vm206, %v1388, 0.0
      %v1399 = vsel %vm205, %v1393, 0.0
      %v1400 = vsel %vm206, %v1389, 0.0
      %v1401 = vsel %vm205, %v1394, 0.0
      %v1402 = vsel %vm206, %v1390, 0.0
      %v1403 = vld [vmem:[%s2] sm:$0xff]
      %v1404 = vld [vmem:[%s2 + $0x8] sm:$0xff]
      %v1405 = vld [vmem:[%s2 + $0x10] sm:$0xff]
      %v1406 = vld [vmem:[%s2 + $0x18] sm:$0xff]
      %1407 = vrot.lane.b32.xlu0 %v1363, 16
      %v1408 = vpop.permute.xlu0 %1407
      %1409 = vrot.lane.b32.xlu0 %v1365, 16
      %v1410 = vpop.permute.xlu0 %1409
      %1411 = vrot.lane.b32.xlu0 %v1367, 16
      %v1412 = vpop.permute.xlu0 %1411
      %1413 = vrot.lane.b32.xlu0 %v1369, 16
      %v1414 = vpop.permute.xlu0 %1413
      %1415 = vrot.lane.b32.xlu0 %v1364, 16
      %v1416 = vpop.permute.xlu0 %1415
      %1417 = vrot.lane.b32.xlu0 %v1366, 16
      %v1418 = vpop.permute.xlu0 %1417
      %1419 = vrot.lane.b32.xlu0 %v1368, 16
      %v1420 = vpop.permute.xlu0 %1419
      %1421 = vrot.lane.b32.xlu0 %v1370, 16
      %v1422 = vpop.permute.xlu0 %1421
      %v1423 = vsel %vm217, %v1408, %v1416
      %v1424 = vsel %vm217, %v1410, %v1418
      %v1425 = vsel %vm217, %v1412, %v1420
      %v1426 = vsel %vm217, %v1414, %v1422
      %v1427 = vsel %vm217, %v1416, %v1408
      %v1428 = vsel %vm217, %v1418, %v1410
      %v1429 = vsel %vm217, %v1420, %v1412
      %v1430 = vsel %vm217, %v1422, %v1414
      %v1431 = vsel %vm222, %v1427, 0.0
      %v1432 = vsel %vm223, %v1423, 0.0
      %v1433 = vsel %vm222, %v1428, 0.0
      %v1434 = vsel %vm223, %v1424, 0.0
      %v1435 = vsel %vm222, %v1429, 0.0
      %v1436 = vsel %vm223, %v1425, 0.0
      %v1437 = vsel %vm222, %v1430, 0.0
      %v1438 = vsel %vm223, %v1426, 0.0
      %s1439 = scalar_lea.vmem %s2, 32
      %v1440 = vld [vmem:[%s1439] sm:$0xff]
      %v1441 = vld [vmem:[%s1439 + $0x8] sm:$0xff]
      %v1442 = vld [vmem:[%s1439 + $0x10] sm:$0xff]
      %v1443 = vld [vmem:[%s1439 + $0x18] sm:$0xff]
      %vm1444 = vcmask 261120
      %v1446 = vsel %vm1444, %v1440, 0
      %v1449 = vsel %vm1444, %v1441, 0
      %v1452 = vsel %vm1444, %v1442, 0
      %v1455 = vsel %vm1444, %v1443, 0
      %1457 = vmatprep.subr.mxu0 %v1432
      %1458 = vmatpush1.msra.mxu0 %v1431
      %1459 = vmatprep.subr.mxu0 %v1434
      %1460 = vmatpush1.msra.mxu0 %v1433
      %1461 = vmatprep.subr.mxu0 %v1436
      %1462 = vmatpush1.msra.mxu0 %v1435
      %1463 = vmatprep.subr.mxu0 %v1438
      %1464 = vmatpush1.msra.mxu0 %v1437
      %1465 = vmatprep.subr.mxu0 0.0
      %1466 = vmatpush1.msra.mxu0 0.0
      %1467 = vmatprep.subr.mxu0 0.0
      %1468 = vmatpush1.msra.mxu0 0.0
      %1469 = vmatprep.subr.mxu0 0.0
      %1470 = vmatpush1.msra.mxu0 0.0
      %1471 = vmatprep.subr.mxu0 0.0
      %1472 = vmatpush1.msra.mxu0 0.0
      %1473 = vmatprep.subr.mxu0 0.0
      %1474 = vmatpush1.msra.mxu0 0.0
      %1475 = vmatprep.subr.mxu0 0.0
      %1476 = vmatpush1.msra.mxu0 0.0
      %1477 = vmatprep.subr.mxu0 0.0
      %1478 = vmatpush1.msra.mxu0 0.0
      %1479 = vmatprep.subr.mxu0 0.0
      %1480 = vmatpush1.msra.mxu0 0.0
      %1481 = vmatprep.subr.mxu0 0.0
      %1482 = vmatpush1.msra.mxu0 0.0
      %1483 = vmatprep.subr.mxu0 0.0
      %1484 = vmatpush1.msra.mxu0 0.0
      %1485 = vmatprep.subr.mxu0 0.0
      %1486 = vmatpush1.msra.mxu0 0.0
      %1487 = vmatprep.subr.mxu0 0.0
      %1488 = vmatpush1.msra.mxu0 0.0
      %1489 = vmatprep.subr.mxu0 0.0
      %1490 = vmatpush1.msra.mxu0 0.0
      %1491 = vmatprep.subr.mxu0 0.0
      %1492 = vmatpush1.msra.mxu0 0.0
      %1493 = vmatprep.subr.mxu0 0.0
      %1494 = vmatpush1.msra.mxu0 0.0
      %1495 = vmatprep.subr.mxu0 0.0
      %1496 = vmatpush1.msra.mxu0 0.0
      %1497 = vmatprep.subr.mxu0 0.0
      %1498 = vmatpush1.msra.mxu0 0.0
      %1499 = vmatprep.subr.mxu0 0.0
      %1500 = vmatpush1.msra.mxu0 0.0
      %1501 = vmatprep.subr.mxu0 0.0
      %1502 = vmatpush1.msra.mxu0 0.0
      %1503 = vmatprep.subr.mxu0 0.0
      %1504 = vmatpush1.msra.mxu0 0.0
      %1505 = vmatprep.subr.mxu0 0.0
      %1506 = vmatpush1.msra.mxu0 0.0
      %1507 = vmatprep.subr.mxu0 0.0
      %1508 = vmatpush1.msra.mxu0 0.0
      %1509 = vmatprep.subr.mxu0 0.0
      %1510 = vmatpush1.msra.mxu0 0.0
      %1511 = vmatprep.subr.mxu0 0.0
      %1512 = vmatpush1.msra.mxu0 0.0
      %1513 = vmatprep.subr.mxu0 0.0
      %1514 = vmatpush1.msra.mxu0 0.0
      %1515 = vmatprep.subr.mxu0 0.0
      %1516 = vmatpush1.msra.mxu0 0.0
      %1517 = vmatprep.subr.mxu0 0.0
      %1518 = vmatpush1.msra.mxu0 0.0
      %1519 = vmatprep.subr.mxu0 0.0
      %1520 = vmatpush1.msra.mxu0 0.0
      %1521 = vmatprep.mubr.f32.mxu0 0.0
      %1522 = vmatmul.mubr.f32.gmra.mrb[0].mxu0 %v1446
      %v1523 = vpop.f32.mrb[0].mxu0
      %v1524 = vadd.f32 0.0, %v1523
      %v1525 = vpop.f32.mrb[0].mxu0
      %v1526 = vadd.f32 0.0, %v1525
      %1527 = vmatprep.mubr.f32.mxu0 0.0
      %1528 = vmatmul.mubr.f32.gmra.mrb[0].mxu0 %v1449
      %v1529 = vpop.f32.mrb[0].mxu0
      %v1530 = vadd.f32 0.0, %v1529
      %v1531 = vpop.f32.mrb[0].mxu0
      %v1532 = vadd.f32 0.0, %v1531
      %1533 = vmatprep.mubr.f32.mxu0 0.0
      %1534 = vmatmul.mubr.f32.gmra.mrb[0].mxu0 %v1452
      %v1535 = vpop.f32.mrb[0].mxu0
      %v1536 = vadd.f32 0.0, %v1535
      %v1537 = vpop.f32.mrb[0].mxu0
      %v1538 = vadd.f32 0.0, %v1537
      %1539 = vmatprep.mubr.f32.mxu0 0.0
      %1540 = vmatmul.mubr.f32.gmra.mrb[0].mxu0 %v1455
      %v1541 = vpop.f32.mrb[0].mxu0
      %v1542 = vadd.f32 0.0, %v1541
      %v1543 = vpop.f32.mrb[0].mxu0
      %v1544 = vadd.f32 0.0, %v1543
      %1545 = vdwg.mxu0
      %v1547 = vsel %vm1444, %v1403, 0
      %v1550 = vsel %vm1444, %v1404, 0
      %v1553 = vsel %vm1444, %v1405, 0
      %v1556 = vsel %vm1444, %v1406, 0
      %1558 = vmatprep.subr.mxu0 %v1396
      %1559 = vmatpush1.msra.mxu0 %v1395
      %1560 = vmatprep.subr.mxu0 %v1398
      %1561 = vmatpush1.msra.mxu0 %v1397
      %1562 = vmatprep.subr.mxu0 %v1400
      %1563 = vmatpush1.msra.mxu0 %v1399
      %1564 = vmatprep.subr.mxu0 %v1402
      %1565 = vmatpush1.msra.mxu0 %v1401
      %1566 = vmatprep.subr.mxu0 0.0
      %1567 = vmatpush1.msra.mxu0 0.0
      %1568 = vmatprep.subr.mxu0 0.0
      %1569 = vmatpush1.msra.mxu0 0.0
      %1570 = vmatprep.subr.mxu0 0.0
      %1571 = vmatpush1.msra.mxu0 0.0
      %1572 = vmatprep.subr.mxu0 0.0
      %1573 = vmatpush1.msra.mxu0 0.0
      %1574 = vmatprep.subr.mxu0 0.0
      %1575 = vmatpush1.msra.mxu0 0.0
      %1576 = vmatprep.subr.mxu0 0.0
      %1577 = vmatpush1.msra.mxu0 0.0
      %1578 = vmatprep.subr.mxu0 0.0
      %1579 = vmatpush1.msra.mxu0 0.0
      %1580 = vmatprep.subr.mxu0 0.0
      %1581 = vmatpush1.msra.mxu0 0.0
      %1582 = vmatprep.subr.mxu0 0.0
      %1583 = vmatpush1.msra.mxu0 0.0
      %1584 = vmatprep.subr.mxu0 0.0
      %1585 = vmatpush1.msra.mxu0 0.0
      %1586 = vmatprep.subr.mxu0 0.0
      %1587 = vmatpush1.msra.mxu0 0.0
      %1588 = vmatprep.subr.mxu0 0.0
      %1589 = vmatpush1.msra.mxu0 0.0
      %1590 = vmatprep.subr.mxu0 0.0
      %1591 = vmatpush1.msra.mxu0 0.0
      %1592 = vmatprep.subr.mxu0 0.0
      %1593 = vmatpush1.msra.mxu0 0.0
      %1594 = vmatprep.subr.mxu0 0.0
      %1595 = vmatpush1.msra.mxu0 0.0
      %1596 = vmatprep.subr.mxu0 0.0
      %1597 = vmatpush1.msra.mxu0 0.0
      %1598 = vmatprep.subr.mxu0 0.0
      %1599 = vmatpush1.msra.mxu0 0.0
      %1600 = vmatprep.subr.mxu0 0.0
      %1601 = vmatpush1.msra.mxu0 0.0
      %1602 = vmatprep.subr.mxu0 0.0
      %1603 = vmatpush1.msra.mxu0 0.0
      %1604 = vmatprep.subr.mxu0 0.0
      %1605 = vmatpush1.msra.mxu0 0.0
      %1606 = vmatprep.subr.mxu0 0.0
      %1607 = vmatpush1.msra.mxu0 0.0
      %1608 = vmatprep.subr.mxu0 0.0
      %1609 = vmatpush1.msra.mxu0 0.0
      %1610 = vmatprep.subr.mxu0 0.0
      %1611 = vmatpush1.msra.mxu0 0.0
      %1612 = vmatprep.subr.mxu0 0.0
      %1613 = vmatpush1.msra.mxu0 0.0
      %1614 = vmatprep.subr.mxu0 0.0
      %1615 = vmatpush1.msra.mxu0 0.0
      %1616 = vmatprep.subr.mxu0 0.0
      %1617 = vmatpush1.msra.mxu0 0.0
      %1618 = vmatprep.subr.mxu0 0.0
      %1619 = vmatpush1.msra.mxu0 0.0
      %1620 = vmatprep.subr.mxu0 0.0
      %1621 = vmatpush1.msra.mxu0 0.0
      %1622 = vmatprep.mubr.f32.mxu0 0.0
      %1623 = vmatmul.mubr.f32.gmra.mrb[0].mxu0 %v1547
      %v1624 = vpop.f32.mrb[0].mxu0
      %v1625 = vadd.f32 %v1524, %v1624
      %v1626 = vpop.f32.mrb[0].mxu0
      %v1627 = vadd.f32 %v1526, %v1626
      %1628 = vmatprep.mubr.f32.mxu0 0.0
      %1629 = vmatmul.mubr.f32.gmra.mrb[0].mxu0 %v1550
      %v1630 = vpop.f32.mrb[0].mxu0
      %v1631 = vadd.f32 %v1530, %v1630
      %v1632 = vpop.f32.mrb[0].mxu0
      %v1633 = vadd.f32 %v1532, %v1632
      %1634 = vmatprep.mubr.f32.mxu0 0.0
      %1635 = vmatmul.mubr.f32.gmra.mrb[0].mxu0 %v1553
      %v1636 = vpop.f32.mrb[0].mxu0
      %v1637 = vadd.f32 %v1536, %v1636
      %v1638 = vpop.f32.mrb[0].mxu0
      %v1639 = vadd.f32 %v1538, %v1638
      %1640 = vmatprep.mubr.f32.mxu0 0.0
      %1641 = vmatmul.mubr.f32.gmra.mrb[0].mxu0 %v1556
      %v1642 = vpop.f32.mrb[0].mxu0
      %v1643 = vadd.f32 %v1542, %v1642
      %v1644 = vpop.f32.mrb[0].mxu0
      %v1645 = vadd.f32 %v1544, %v1644
      %1646 = vdwg.mxu0
      %1647 = vrot.lane.b32.xlu0 %v1363, 15
      %v1648 = vpop.permute.xlu0 %1647
      %1649 = vrot.lane.b32.xlu0 %v1365, 15
      %v1650 = vpop.permute.xlu0 %1649
      %1651 = vrot.lane.b32.xlu0 %v1367, 15
      %v1652 = vpop.permute.xlu0 %1651
      %1653 = vrot.lane.b32.xlu0 %v1369, 15
      %v1654 = vpop.permute.xlu0 %1653
      %1655 = vrot.lane.b32.xlu0 %v1364, 15
      %v1656 = vpop.permute.xlu0 %1655
      %1657 = vrot.lane.b32.xlu0 %v1366, 15
      %v1658 = vpop.permute.xlu0 %1657
      %1659 = vrot.lane.b32.xlu0 %v1368, 15
      %v1660 = vpop.permute.xlu0 %1659
      %1661 = vrot.lane.b32.xlu0 %v1370, 15
      %v1662 = vpop.permute.xlu0 %1661
      %v1663 = vsel %vm451, %v1648, %v1656
      %v1664 = vsel %vm451, %v1650, %v1658
      %v1665 = vsel %vm451, %v1652, %v1660
      %v1666 = vsel %vm451, %v1654, %v1662
      %v1667 = vsel %vm451, %v1656, %v1648
      %v1668 = vsel %vm451, %v1658, %v1650
      %v1669 = vsel %vm451, %v1660, %v1652
      %v1670 = vsel %vm451, %v1662, %v1654
      %v1671 = vsel %vm456, %v1667, 0.0
      %v1672 = vsel %vm457, %v1663, 0.0
      %v1673 = vsel %vm456, %v1668, 0.0
      %v1674 = vsel %vm457, %v1664, 0.0
      %v1675 = vsel %vm456, %v1669, 0.0
      %v1676 = vsel %vm457, %v1665, 0.0
      %v1677 = vsel %vm456, %v1670, 0.0
      %v1678 = vsel %vm457, %v1666, 0.0
      %s1679 = scalar_lea.vmem %s2, 64
      %v1680 = vld [vmem:[%s1679] sm:$0xff]
      %v1681 = vld [vmem:[%s1679 + $0x8] sm:$0xff]
      %v1682 = vld [vmem:[%s1679 + $0x10] sm:$0xff]
      %v1683 = vld [vmem:[%s1679 + $0x18] sm:$0xff]
      %v1685 = vsel %vm1444, %v1680, 0
      %v1688 = vsel %vm1444, %v1681, 0
      %v1691 = vsel %vm1444, %v1682, 0
      %v1694 = vsel %vm1444, %v1683, 0
      %1696 = vmatprep.subr.mxu0 %v1672
      %1697 = vmatpush1.msra.mxu0 %v1671
      %1698 = vmatprep.subr.mxu0 %v1674
      %1699 = vmatpush1.msra.mxu0 %v1673
      %1700 = vmatprep.subr.mxu0 %v1676
      %1701 = vmatpush1.msra.mxu0 %v1675
      %1702 = vmatprep.subr.mxu0 %v1678
      %1703 = vmatpush1.msra.mxu0 %v1677
      %1704 = vmatprep.subr.mxu0 0.0
      %1705 = vmatpush1.msra.mxu0 0.0
      %1706 = vmatprep.subr.mxu0 0.0
      %1707 = vmatpush1.msra.mxu0 0.0
      %1708 = vmatprep.subr.mxu0 0.0
      %1709 = vmatpush1.msra.mxu0 0.0
      %1710 = vmatprep.subr.mxu0 0.0
      %1711 = vmatpush1.msra.mxu0 0.0
      %1712 = vmatprep.subr.mxu0 0.0
      %1713 = vmatpush1.msra.mxu0 0.0
      %1714 = vmatprep.subr.mxu0 0.0
      %1715 = vmatpush1.msra.mxu0 0.0
      %1716 = vmatprep.subr.mxu0 0.0
      %1717 = vmatpush1.msra.mxu0 0.0
      %1718 = vmatprep.subr.mxu0 0.0
      %1719 = vmatpush1.msra.mxu0 0.0
      %1720 = vmatprep.subr.mxu0 0.0
      %1721 = vmatpush1.msra.mxu0 0.0
      %1722 = vmatprep.subr.mxu0 0.0
      %1723 = vmatpush1.msra.mxu0 0.0
      %1724 = vmatprep.subr.mxu0 0.0
      %1725 = vmatpush1.msra.mxu0 0.0
      %1726 = vmatprep.subr.mxu0 0.0
      %1727 = vmatpush1.msra.mxu0 0.0
      %1728 = vmatprep.subr.mxu0 0.0
      %1729 = vmatpush1.msra.mxu0 0.0
      %1730 = vmatprep.subr.mxu0 0.0
      %1731 = vmatpush1.msra.mxu0 0.0
      %1732 = vmatprep.subr.mxu0 0.0
      %1733 = vmatpush1.msra.mxu0 0.0
      %1734 = vmatprep.subr.mxu0 0.0
      %1735 = vmatpush1.msra.mxu0 0.0
      %1736 = vmatprep.subr.mxu0 0.0
      %1737 = vmatpush1.msra.mxu0 0.0
      %1738 = vmatprep.subr.mxu0 0.0
      %1739 = vmatpush1.msra.mxu0 0.0
      %1740 = vmatprep.subr.mxu0 0.0
      %1741 = vmatpush1.msra.mxu0 0.0
      %1742 = vmatprep.subr.mxu0 0.0
      %1743 = vmatpush1.msra.mxu0 0.0
      %1744 = vmatprep.subr.mxu0 0.0
      %1745 = vmatpush1.msra.mxu0 0.0
      %1746 = vmatprep.subr.mxu0 0.0
      %1747 = vmatpush1.msra.mxu0 0.0
      %1748 = vmatprep.subr.mxu0 0.0
      %1749 = vmatpush1.msra.mxu0 0.0
      %1750 = vmatprep.subr.mxu0 0.0
      %1751 = vmatpush1.msra.mxu0 0.0
      %1752 = vmatprep.subr.mxu0 0.0
      %1753 = vmatpush1.msra.mxu0 0.0
      %1754 = vmatprep.subr.mxu0 0.0
      %1755 = vmatpush1.msra.mxu0 0.0
      %1756 = vmatprep.subr.mxu0 0.0
      %1757 = vmatpush1.msra.mxu0 0.0
      %1758 = vmatprep.subr.mxu0 0.0
      %1759 = vmatpush1.msra.mxu0 0.0
      %1760 = vmatprep.mubr.f32.mxu0 0.0
      %1761 = vmatmul.mubr.f32.gmra.mrb[0].mxu0 %v1685
      %v1762 = vpop.f32.mrb[0].mxu0
      %v1763 = vadd.f32 0.0, %v1762
      %v1764 = vpop.f32.mrb[0].mxu0
      %v1765 = vadd.f32 0.0, %v1764
      %1766 = vmatprep.mubr.f32.mxu0 0.0
      %1767 = vmatmul.mubr.f32.gmra.mrb[0].mxu0 %v1688
      %v1768 = vpop.f32.mrb[0].mxu0
      %v1769 = vadd.f32 0.0, %v1768
      %v1770 = vpop.f32.mrb[0].mxu0
      %v1771 = vadd.f32 0.0, %v1770
      %1772 = vmatprep.mubr.f32.mxu0 0.0
      %1773 = vmatmul.mubr.f32.gmra.mrb[0].mxu0 %v1691
      %v1774 = vpop.f32.mrb[0].mxu0
      %v1775 = vadd.f32 0.0, %v1774
      %v1776 = vpop.f32.mrb[0].mxu0
      %v1777 = vadd.f32 0.0, %v1776
      %1778 = vmatprep.mubr.f32.mxu0 0.0
      %1779 = vmatmul.mubr.f32.gmra.mrb[0].mxu0 %v1694
      %v1780 = vpop.f32.mrb[0].mxu0
      %v1781 = vadd.f32 0.0, %v1780
      %v1782 = vpop.f32.mrb[0].mxu0
      %v1783 = vadd.f32 0.0, %v1782
      %1784 = vdwg.mxu0
      %v1785 = vadd.f32 %v1625, %v1763
      %v1786 = vadd.f32 %v1627, %v1765
      %v1787 = vadd.f32 %v1631, %v1769
      %v1788 = vadd.f32 %v1633, %v1771
      %v1789 = vadd.f32 %v1637, %v1775
      %v1790 = vadd.f32 %v1639, %v1777
      %v1791 = vadd.f32 %v1643, %v1781
      %v1792 = vadd.f32 %v1645, %v1783
      %1793 = vrot.lane.b32.xlu0 %v1363, 1
      %v1794 = vpop.permute.xlu0 %1793
      %1795 = vrot.lane.b32.xlu0 %v1365, 1
      %v1796 = vpop.permute.xlu0 %1795
      %1797 = vrot.lane.b32.xlu0 %v1367, 1
      %v1798 = vpop.permute.xlu0 %1797
      %1799 = vrot.lane.b32.xlu0 %v1369, 1
      %v1800 = vpop.permute.xlu0 %1799
      %1801 = vrot.lane.b32.xlu0 %v1364, 1
      %v1802 = vpop.permute.xlu0 %1801
      %1803 = vrot.lane.b32.xlu0 %v1366, 1
      %v1804 = vpop.permute.xlu0 %1803
      %1805 = vrot.lane.b32.xlu0 %v1368, 1
      %v1806 = vpop.permute.xlu0 %1805
      %1807 = vrot.lane.b32.xlu0 %v1370, 1
      %v1808 = vpop.permute.xlu0 %1807
      %v1809 = vsel %vm584, %v1794, %v1802
      %v1810 = vsel %vm584, %v1796, %v1804
      %v1811 = vsel %vm584, %v1798, %v1806
      %v1812 = vsel %vm584, %v1800, %v1808
      %v1813 = vsel %vm584, %v1802, %v1794
      %v1814 = vsel %vm584, %v1804, %v1796
      %v1815 = vsel %vm584, %v1806, %v1798
      %v1816 = vsel %vm584, %v1808, %v1800
      %v1817 = vsel %vm589, %v1813, 0.0
      %v1818 = vsel %vm590, %v1809, 0.0
      %v1819 = vsel %vm589, %v1814, 0.0
      %v1820 = vsel %vm590, %v1810, 0.0
      %v1821 = vsel %vm589, %v1815, 0.0
      %v1822 = vsel %vm590, %v1811, 0.0
      %v1823 = vsel %vm589, %v1816, 0.0
      %v1824 = vsel %vm590, %v1812, 0.0
      %s1825 = scalar_lea.vmem %s2, 96
      %v1826 = vld [vmem:[%s1825] sm:$0xff]
      %v1827 = vld [vmem:[%s1825 + $0x8] sm:$0xff]
      %v1828 = vld [vmem:[%s1825 + $0x10] sm:$0xff]
      %v1829 = vld [vmem:[%s1825 + $0x18] sm:$0xff]
      %v1831 = vsel %vm1444, %v1826, 0
      %v1834 = vsel %vm1444, %v1827, 0
      %v1837 = vsel %vm1444, %v1828, 0
      %v1840 = vsel %vm1444, %v1829, 0
      %1842 = vmatprep.subr.mxu0 %v1818
      %1843 = vmatpush1.msra.mxu0 %v1817
      %1844 = vmatprep.subr.mxu0 %v1820
      %1845 = vmatpush1.msra.mxu0 %v1819
      %1846 = vmatprep.subr.mxu0 %v1822
      %1847 = vmatpush1.msra.mxu0 %v1821
      %1848 = vmatprep.subr.mxu0 %v1824
      %1849 = vmatpush1.msra.mxu0 %v1823
      %1850 = vmatprep.subr.mxu0 0.0
      %1851 = vmatpush1.msra.mxu0 0.0
      %1852 = vmatprep.subr.mxu0 0.0
      %1853 = vmatpush1.msra.mxu0 0.0
      %1854 = vmatprep.subr.mxu0 0.0
      %1855 = vmatpush1.msra.mxu0 0.0
      %1856 = vmatprep.subr.mxu0 0.0
      %1857 = vmatpush1.msra.mxu0 0.0
      %1858 = vmatprep.subr.mxu0 0.0
      %1859 = vmatpush1.msra.mxu0 0.0
      %1860 = vmatprep.subr.mxu0 0.0
      %1861 = vmatpush1.msra.mxu0 0.0
      %1862 = vmatprep.subr.mxu0 0.0
      %1863 = vmatpush1.msra.mxu0 0.0
      %1864 = vmatprep.subr.mxu0 0.0
      %1865 = vmatpush1.msra.mxu0 0.0
      %1866 = vmatprep.subr.mxu0 0.0
      %1867 = vmatpush1.msra.mxu0 0.0
      %1868 = vmatprep.subr.mxu0 0.0
      %1869 = vmatpush1.msra.mxu0 0.0
      %1870 = vmatprep.subr.mxu0 0.0
      %1871 = vmatpush1.msra.mxu0 0.0
      %1872 = vmatprep.subr.mxu0 0.0
      %1873 = vmatpush1.msra.mxu0 0.0
      %1874 = vmatprep.subr.mxu0 0.0
      %1875 = vmatpush1.msra.mxu0 0.0
      %1876 = vmatprep.subr.mxu0 0.0
      %1877 = vmatpush1.msra.mxu0 0.0
      %1878 = vmatprep.subr.mxu0 0.0
      %1879 = vmatpush1.msra.mxu0 0.0
      %1880 = vmatprep.subr.mxu0 0.0
      %1881 = vmatpush1.msra.mxu0 0.0
      %1882 = vmatprep.subr.mxu0 0.0
      %1883 = vmatpush1.msra.mxu0 0.0
      %1884 = vmatprep.subr.mxu0 0.0
      %1885 = vmatpush1.msra.mxu0 0.0
      %1886 = vmatprep.subr.mxu0 0.0
      %1887 = vmatpush1.msra.mxu0 0.0
      %1888 = vmatprep.subr.mxu0 0.0
      %1889 = vmatpush1.msra.mxu0 0.0
      %1890 = vmatprep.subr.mxu0 0.0
      %1891 = vmatpush1.msra.mxu0 0.0
      %1892 = vmatprep.subr.mxu0 0.0
      %1893 = vmatpush1.msra.mxu0 0.0
      %1894 = vmatprep.subr.mxu0 0.0
      %1895 = vmatpush1.msra.mxu0 0.0
      %1896 = vmatprep.subr.mxu0 0.0
      %1897 = vmatpush1.msra.mxu0 0.0
      %1898 = vmatprep.subr.mxu0 0.0
      %1899 = vmatpush1.msra.mxu0 0.0
      %1900 = vmatprep.subr.mxu0 0.0
      %1901 = vmatpush1.msra.mxu0 0.0
      %1902 = vmatprep.subr.mxu0 0.0
      %1903 = vmatpush1.msra.mxu0 0.0
      %1904 = vmatprep.subr.mxu0 0.0
      %1905 = vmatpush1.msra.mxu0 0.0
      %1906 = vmatprep.mubr.f32.mxu0 0.0
      %1907 = vmatmul.mubr.f32.gmra.mrb[0].mxu0 %v1831
      %v1908 = vpop.f32.mrb[0].mxu0
      %v1909 = vadd.f32 0.0, %v1908
      %v1910 = vpop.f32.mrb[0].mxu0
      %v1911 = vadd.f32 0.0, %v1910
      %1912 = vmatprep.mubr.f32.mxu0 0.0
      %1913 = vmatmul.mubr.f32.gmra.mrb[0].mxu0 %v1834
      %v1914 = vpop.f32.mrb[0].mxu0
      %v1915 = vadd.f32 0.0, %v1914
      %v1916 = vpop.f32.mrb[0].mxu0
      %v1917 = vadd.f32 0.0, %v1916
      %1918 = vmatprep.mubr.f32.mxu0 0.0
      %1919 = vmatmul.mubr.f32.gmra.mrb[0].mxu0 %v1837
      %v1920 = vpop.f32.mrb[0].mxu0
      %v1921 = vadd.f32 0.0, %v1920
      %v1922 = vpop.f32.mrb[0].mxu0
      %v1923 = vadd.f32 0.0, %v1922
      %1924 = vmatprep.mubr.f32.mxu0 0.0
      %1925 = vmatmul.mubr.f32.gmra.mrb[0].mxu0 %v1840
      %v1926 = vpop.f32.mrb[0].mxu0
      %v1927 = vadd.f32 0.0, %v1926
      %v1928 = vpop.f32.mrb[0].mxu0
      %v1929 = vadd.f32 0.0, %v1928
      %1930 = vdwg.mxu0
      %v1931 = vadd.f32 %v1785, %v1909
      %v1932 = vadd.f32 %v1786, %v1911
      %v1933 = vadd.f32 %v1787, %v1915
      %v1934 = vadd.f32 %v1788, %v1917
      %v1935 = vadd.f32 %v1789, %v1921
      %v1936 = vadd.f32 %v1790, %v1923
      %v1937 = vadd.f32 %v1791, %v1927
      %v1938 = vadd.f32 %v1792, %v1929
      %s1939 = scalar_lea.vmem %s2, 128
      %v1940 = vld [vmem:[%s1939] sm:$0xff]
      %v1941 = vld [vmem:[%s1939 + $0x8] sm:$0xff]
      %v1942 = vld [vmem:[%s1939 + $0x10] sm:$0xff]
      %v1943 = vld [vmem:[%s1939 + $0x18] sm:$0xff]
      %v1945 = vsel %vm1444, %v1940, 0
      %v1948 = vsel %vm1444, %v1941, 0
      %v1951 = vsel %vm1444, %v1942, 0
      %v1954 = vsel %vm1444, %v1943, 0
      %1956 = vmatprep.subr.mxu0 %v1364
      %1957 = vmatpush1.msra.mxu0 %v1363
      %1958 = vmatprep.subr.mxu0 %v1366
      %1959 = vmatpush1.msra.mxu0 %v1365
      %1960 = vmatprep.subr.mxu0 %v1368
      %1961 = vmatpush1.msra.mxu0 %v1367
      %1962 = vmatprep.subr.mxu0 %v1370
      %1963 = vmatpush1.msra.mxu0 %v1369
      %1964 = vmatprep.subr.mxu0 0.0
      %1965 = vmatpush1.msra.mxu0 0.0
      %1966 = vmatprep.subr.mxu0 0.0
      %1967 = vmatpush1.msra.mxu0 0.0
      %1968 = vmatprep.subr.mxu0 0.0
      %1969 = vmatpush1.msra.mxu0 0.0
      %1970 = vmatprep.subr.mxu0 0.0
      %1971 = vmatpush1.msra.mxu0 0.0
      %1972 = vmatprep.subr.mxu0 0.0
      %1973 = vmatpush1.msra.mxu0 0.0
      %1974 = vmatprep.subr.mxu0 0.0
      %1975 = vmatpush1.msra.mxu0 0.0
      %1976 = vmatprep.subr.mxu0 0.0
      %1977 = vmatpush1.msra.mxu0 0.0
      %1978 = vmatprep.subr.mxu0 0.0
      %1979 = vmatpush1.msra.mxu0 0.0
      %1980 = vmatprep.subr.mxu0 0.0
      %1981 = vmatpush1.msra.mxu0 0.0
      %1982 = vmatprep.subr.mxu0 0.0
      %1983 = vmatpush1.msra.mxu0 0.0
      %1984 = vmatprep.subr.mxu0 0.0
      %1985 = vmatpush1.msra.mxu0 0.0
      %1986 = vmatprep.subr.mxu0 0.0
      %1987 = vmatpush1.msra.mxu0 0.0
      %1988 = vmatprep.subr.mxu0 0.0
      %1989 = vmatpush1.msra.mxu0 0.0
      %1990 = vmatprep.subr.mxu0 0.0
      %1991 = vmatpush1.msra.mxu0 0.0
      %1992 = vmatprep.subr.mxu0 0.0
      %1993 = vmatpush1.msra.mxu0 0.0
      %1994 = vmatprep.subr.mxu0 0.0
      %1995 = vmatpush1.msra.mxu0 0.0
      %1996 = vmatprep.subr.mxu0 0.0
      %1997 = vmatpush1.msra.mxu0 0.0
      %1998 = vmatprep.subr.mxu0 0.0
      %1999 = vmatpush1.msra.mxu0 0.0
      %2000 = vmatprep.subr.mxu0 0.0
      %2001 = vmatpush1.msra.mxu0 0.0
      %2002 = vmatprep.subr.mxu0 0.0
      %2003 = vmatpush1.msra.mxu0 0.0
      %2004 = vmatprep.subr.mxu0 0.0
      %2005 = vmatpush1.msra.mxu0 0.0
      %2006 = vmatprep.subr.mxu0 0.0
      %2007 = vmatpush1.msra.mxu0 0.0
      %2008 = vmatprep.subr.mxu0 0.0
      %2009 = vmatpush1.msra.mxu0 0.0
      %2010 = vmatprep.subr.mxu0 0.0
      %2011 = vmatpush1.msra.mxu0 0.0
      %2012 = vmatprep.subr.mxu0 0.0
      %2013 = vmatpush1.msra.mxu0 0.0
      %2014 = vmatprep.subr.mxu0 0.0
      %2015 = vmatpush1.msra.mxu0 0.0
      %2016 = vmatprep.subr.mxu0 0.0
      %2017 = vmatpush1.msra.mxu0 0.0
      %2018 = vmatprep.subr.mxu0 0.0
      %2019 = vmatpush1.msra.mxu0 0.0
      %2020 = vmatprep.mubr.f32.mxu0 0.0
      %2021 = vmatmul.mubr.f32.gmra.mrb[0].mxu0 %v1945
      %v2022 = vpop.f32.mrb[0].mxu0
      %v2023 = vadd.f32 0.0, %v2022
      %v2024 = vpop.f32.mrb[0].mxu0
      %v2025 = vadd.f32 0.0, %v2024
      %2026 = vmatprep.mubr.f32.mxu0 0.0
      %2027 = vmatmul.mubr.f32.gmra.mrb[0].mxu0 %v1948
      %v2028 = vpop.f32.mrb[0].mxu0
      %v2029 = vadd.f32 0.0, %v2028
      %v2030 = vpop.f32.mrb[0].mxu0
      %v2031 = vadd.f32 0.0, %v2030
      %2032 = vmatprep.mubr.f32.mxu0 0.0
      %2033 = vmatmul.mubr.f32.gmra.mrb[0].mxu0 %v1951
      %v2034 = vpop.f32.mrb[0].mxu0
      %v2035 = vadd.f32 0.0, %v2034
      %v2036 = vpop.f32.mrb[0].mxu0
      %v2037 = vadd.f32 0.0, %v2036
      %2038 = vmatprep.mubr.f32.mxu0 0.0
      %2039 = vmatmul.mubr.f32.gmra.mrb[0].mxu0 %v1954
      %v2040 = vpop.f32.mrb[0].mxu0
      %v2041 = vadd.f32 0.0, %v2040
      %v2042 = vpop.f32.mrb[0].mxu0
      %v2043 = vadd.f32 0.0, %v2042
      %2044 = vdwg.mxu0
      %v2045 = vadd.f32 %v1931, %v2023
      %v2046 = vadd.f32 %v1932, %v2025
      %v2047 = vadd.f32 %v1933, %v2029
      %v2048 = vadd.f32 %v1934, %v2031
      %v2049 = vadd.f32 %v1935, %v2035
      %v2050 = vadd.f32 %v1936, %v2037
      %v2051 = vadd.f32 %v1937, %v2041
      %v2052 = vadd.f32 %v1938, %v2043
      %2053 = vrot.lane.b32.xlu0 %v1363, 127
      %v2054 = vpop.permute.xlu0 %2053
      %2055 = vrot.lane.b32.xlu0 %v1365, 127
      %v2056 = vpop.permute.xlu0 %2055
      %2057 = vrot.lane.b32.xlu0 %v1367, 127
      %v2058 = vpop.permute.xlu0 %2057
      %2059 = vrot.lane.b32.xlu0 %v1369, 127
      %v2060 = vpop.permute.xlu0 %2059
      %2061 = vrot.lane.b32.xlu0 %v1364, 127
      %v2062 = vpop.permute.xlu0 %2061
      %2063 = vrot.lane.b32.xlu0 %v1366, 127
      %v2064 = vpop.permute.xlu0 %2063
      %2065 = vrot.lane.b32.xlu0 %v1368, 127
      %v2066 = vpop.permute.xlu0 %2065
      %2067 = vrot.lane.b32.xlu0 %v1370, 127
      %v2068 = vpop.permute.xlu0 %2067
      %v2069 = vsel %vm835, %v2054, %v2062
      %v2070 = vsel %vm835, %v2056, %v2064
      %v2071 = vsel %vm835, %v2058, %v2066
      %v2072 = vsel %vm835, %v2060, %v2068
      %v2073 = vsel %vm835, %v2062, %v2054
      %v2074 = vsel %vm835, %v2064, %v2056
      %v2075 = vsel %vm835, %v2066, %v2058
      %v2076 = vsel %vm835, %v2068, %v2060
      %v2077 = vsel %vm840, %v2069, 0.0
      %v2078 = vsel %vm841, %v2073, 0.0
      %v2079 = vsel %vm840, %v2070, 0.0
      %v2080 = vsel %vm841, %v2074, 0.0
      %v2081 = vsel %vm840, %v2071, 0.0
      %v2082 = vsel %vm841, %v2075, 0.0
      %v2083 = vsel %vm840, %v2072, 0.0
      %v2084 = vsel %vm841, %v2076, 0.0
      %s2085 = scalar_lea.vmem %s2, 160
      %v2086 = vld [vmem:[%s2085] sm:$0xff]
      %v2087 = vld [vmem:[%s2085 + $0x8] sm:$0xff]
      %v2088 = vld [vmem:[%s2085 + $0x10] sm:$0xff]
      %v2089 = vld [vmem:[%s2085 + $0x18] sm:$0xff]
      %v2091 = vsel %vm1444, %v2086, 0
      %v2094 = vsel %vm1444, %v2087, 0
      %v2097 = vsel %vm1444, %v2088, 0
      %v2100 = vsel %vm1444, %v2089, 0
      %2102 = vmatprep.subr.mxu0 %v2078
      %2103 = vmatpush1.msra.mxu0 %v2077
      %2104 = vmatprep.subr.mxu0 %v2080
      %2105 = vmatpush1.msra.mxu0 %v2079
      %2106 = vmatprep.subr.mxu0 %v2082
      %2107 = vmatpush1.msra.mxu0 %v2081
      %2108 = vmatprep.subr.mxu0 %v2084
      %2109 = vmatpush1.msra.mxu0 %v2083
      %2110 = vmatprep.subr.mxu0 0.0
      %2111 = vmatpush1.msra.mxu0 0.0
      %2112 = vmatprep.subr.mxu0 0.0
      %2113 = vmatpush1.msra.mxu0 0.0
      %2114 = vmatprep.subr.mxu0 0.0
      %2115 = vmatpush1.msra.mxu0 0.0
      %2116 = vmatprep.subr.mxu0 0.0
      %2117 = vmatpush1.msra.mxu0 0.0
      %2118 = vmatprep.subr.mxu0 0.0
      %2119 = vmatpush1.msra.mxu0 0.0
      %2120 = vmatprep.subr.mxu0 0.0
      %2121 = vmatpush1.msra.mxu0 0.0
      %2122 = vmatprep.subr.mxu0 0.0
      %2123 = vmatpush1.msra.mxu0 0.0
      %2124 = vmatprep.subr.mxu0 0.0
      %2125 = vmatpush1.msra.mxu0 0.0
      %2126 = vmatprep.subr.mxu0 0.0
      %2127 = vmatpush1.msra.mxu0 0.0
      %2128 = vmatprep.subr.mxu0 0.0
      %2129 = vmatpush1.msra.mxu0 0.0
      %2130 = vmatprep.subr.mxu0 0.0
      %2131 = vmatpush1.msra.mxu0 0.0
      %2132 = vmatprep.subr.mxu0 0.0
      %2133 = vmatpush1.msra.mxu0 0.0
      %2134 = vmatprep.subr.mxu0 0.0
      %2135 = vmatpush1.msra.mxu0 0.0
      %2136 = vmatprep.subr.mxu0 0.0
      %2137 = vmatpush1.msra.mxu0 0.0
      %2138 = vmatprep.subr.mxu0 0.0
      %2139 = vmatpush1.msra.mxu0 0.0
      %2140 = vmatprep.subr.mxu0 0.0
      %2141 = vmatpush1.msra.mxu0 0.0
      %2142 = vmatprep.subr.mxu0 0.0
      %2143 = vmatpush1.msra.mxu0 0.0
      %2144 = vmatprep.subr.mxu0 0.0
      %2145 = vmatpush1.msra.mxu0 0.0
      %2146 = vmatprep.subr.mxu0 0.0
      %2147 = vmatpush1.msra.mxu0 0.0
      %2148 = vmatprep.subr.mxu0 0.0
      %2149 = vmatpush1.msra.mxu0 0.0
      %2150 = vmatprep.subr.mxu0 0.0
      %2151 = vmatpush1.msra.mxu0 0.0
      %2152 = vmatprep.subr.mxu0 0.0
      %2153 = vmatpush1.msra.mxu0 0.0
      %2154 = vmatprep.subr.mxu0 0.0
      %2155 = vmatpush1.msra.mxu0 0.0
      %2156 = vmatprep.subr.mxu0 0.0
      %2157 = vmatpush1.msra.mxu0 0.0
      %2158 = vmatprep.subr.mxu0 0.0
      %2159 = vmatpush1.msra.mxu0 0.0
      %2160 = vmatprep.subr.mxu0 0.0
      %2161 = vmatpush1.msra.mxu0 0.0
      %2162 = vmatprep.subr.mxu0 0.0
      %2163 = vmatpush1.msra.mxu0 0.0
      %2164 = vmatprep.subr.mxu0 0.0
      %2165 = vmatpush1.msra.mxu0 0.0
      %2166 = vmatprep.mubr.f32.mxu0 0.0
      %2167 = vmatmul.mubr.f32.gmra.mrb[0].mxu0 %v2091
      %v2168 = vpop.f32.mrb[0].mxu0
      %v2169 = vadd.f32 0.0, %v2168
      %v2170 = vpop.f32.mrb[0].mxu0
      %v2171 = vadd.f32 0.0, %v2170
      %2172 = vmatprep.mubr.f32.mxu0 0.0
      %2173 = vmatmul.mubr.f32.gmra.mrb[0].mxu0 %v2094
      %v2174 = vpop.f32.mrb[0].mxu0
      %v2175 = vadd.f32 0.0, %v2174
      %v2176 = vpop.f32.mrb[0].mxu0
      %v2177 = vadd.f32 0.0, %v2176
      %2178 = vmatprep.mubr.f32.mxu0 0.0
      %2179 = vmatmul.mubr.f32.gmra.mrb[0].mxu0 %v2097
      %v2180 = vpop.f32.mrb[0].mxu0
      %v2181 = vadd.f32 0.0, %v2180
      %v2182 = vpop.f32.mrb[0].mxu0
      %v2183 = vadd.f32 0.0, %v2182
      %2184 = vmatprep.mubr.f32.mxu0 0.0
      %2185 = vmatmul.mubr.f32.gmra.mrb[0].mxu0 %v2100
      %v2186 = vpop.f32.mrb[0].mxu0
      %v2187 = vadd.f32 0.0, %v2186
      %v2188 = vpop.f32.mrb[0].mxu0
      %v2189 = vadd.f32 0.0, %v2188
      %2190 = vdwg.mxu0
      %v2191 = vadd.f32 %v2045, %v2169
      %v2192 = vadd.f32 %v2046, %v2171
      %v2193 = vadd.f32 %v2047, %v2175
      %v2194 = vadd.f32 %v2048, %v2177
      %v2195 = vadd.f32 %v2049, %v2181
      %v2196 = vadd.f32 %v2050, %v2183
      %v2197 = vadd.f32 %v2051, %v2187
      %v2198 = vadd.f32 %v2052, %v2189
      %2199 = vrot.lane.b32.xlu0 %v1363, 113
      %v2200 = vpop.permute.xlu0 %2199
      %2201 = vrot.lane.b32.xlu0 %v1365, 113
      %v2202 = vpop.permute.xlu0 %2201
      %2203 = vrot.lane.b32.xlu0 %v1367, 113
      %v2204 = vpop.permute.xlu0 %2203
      %2205 = vrot.lane.b32.xlu0 %v1369, 113
      %v2206 = vpop.permute.xlu0 %2205
      %2207 = vrot.lane.b32.xlu0 %v1364, 113
      %v2208 = vpop.permute.xlu0 %2207
      %2209 = vrot.lane.b32.xlu0 %v1366, 113
      %v2210 = vpop.permute.xlu0 %2209
      %2211 = vrot.lane.b32.xlu0 %v1368, 113
      %v2212 = vpop.permute.xlu0 %2211
      %2213 = vrot.lane.b32.xlu0 %v1370, 113
      %v2214 = vpop.permute.xlu0 %2213
      %v2215 = vsel %vm968, %v2200, %v2208
      %v2216 = vsel %vm968, %v2202, %v2210
      %v2217 = vsel %vm968, %v2204, %v2212
      %v2218 = vsel %vm968, %v2206, %v2214
      %v2219 = vsel %vm968, %v2208, %v2200
      %v2220 = vsel %vm968, %v2210, %v2202
      %v2221 = vsel %vm968, %v2212, %v2204
      %v2222 = vsel %vm968, %v2214, %v2206
      %v2223 = vsel %vm973, %v2215, 0.0
      %v2224 = vsel %vm974, %v2219, 0.0
      %v2225 = vsel %vm973, %v2216, 0.0
      %v2226 = vsel %vm974, %v2220, 0.0
      %v2227 = vsel %vm973, %v2217, 0.0
      %v2228 = vsel %vm974, %v2221, 0.0
      %v2229 = vsel %vm973, %v2218, 0.0
      %v2230 = vsel %vm974, %v2222, 0.0
      %s2231 = scalar_lea.vmem %s2, 192
      %v2232 = vld [vmem:[%s2231] sm:$0xff]
      %v2233 = vld [vmem:[%s2231 + $0x8] sm:$0xff]
      %v2234 = vld [vmem:[%s2231 + $0x10] sm:$0xff]
      %v2235 = vld [vmem:[%s2231 + $0x18] sm:$0xff]
      %v2237 = vsel %vm1444, %v2232, 0
      %v2240 = vsel %vm1444, %v2233, 0
      %v2243 = vsel %vm1444, %v2234, 0
      %v2246 = vsel %vm1444, %v2235, 0
      %2248 = vmatprep.subr.mxu0 %v2224
      %2249 = vmatpush1.msra.mxu0 %v2223
      %2250 = vmatprep.subr.mxu0 %v2226
      %2251 = vmatpush1.msra.mxu0 %v2225
      %2252 = vmatprep.subr.mxu0 %v2228
      %2253 = vmatpush1.msra.mxu0 %v2227
      %2254 = vmatprep.subr.mxu0 %v2230
      %2255 = vmatpush1.msra.mxu0 %v2229
      %2256 = vmatprep.subr.mxu0 0.0
      %2257 = vmatpush1.msra.mxu0 0.0
      %2258 = vmatprep.subr.mxu0 0.0
      %2259 = vmatpush1.msra.mxu0 0.0
      %2260 = vmatprep.subr.mxu0 0.0
      %2261 = vmatpush1.msra.mxu0 0.0
      %2262 = vmatprep.subr.mxu0 0.0
      %2263 = vmatpush1.msra.mxu0 0.0
      %2264 = vmatprep.subr.mxu0 0.0
      %2265 = vmatpush1.msra.mxu0 0.0
      %2266 = vmatprep.subr.mxu0 0.0
      %2267 = vmatpush1.msra.mxu0 0.0
      %2268 = vmatprep.subr.mxu0 0.0
      %2269 = vmatpush1.msra.mxu0 0.0
      %2270 = vmatprep.subr.mxu0 0.0
      %2271 = vmatpush1.msra.mxu0 0.0
      %2272 = vmatprep.subr.mxu0 0.0
      %2273 = vmatpush1.msra.mxu0 0.0
      %2274 = vmatprep.subr.mxu0 0.0
      %2275 = vmatpush1.msra.mxu0 0.0
      %2276 = vmatprep.subr.mxu0 0.0
      %2277 = vmatpush1.msra.mxu0 0.0
      %2278 = vmatprep.subr.mxu0 0.0
      %2279 = vmatpush1.msra.mxu0 0.0
      %2280 = vmatprep.subr.mxu0 0.0
      %2281 = vmatpush1.msra.mxu0 0.0
      %2282 = vmatprep.subr.mxu0 0.0
      %2283 = vmatpush1.msra.mxu0 0.0
      %2284 = vmatprep.subr.mxu0 0.0
      %2285 = vmatpush1.msra.mxu0 0.0
      %2286 = vmatprep.subr.mxu0 0.0
      %2287 = vmatpush1.msra.mxu0 0.0
      %2288 = vmatprep.subr.mxu0 0.0
      %2289 = vmatpush1.msra.mxu0 0.0
      %2290 = vmatprep.subr.mxu0 0.0
      %2291 = vmatpush1.msra.mxu0 0.0
      %2292 = vmatprep.subr.mxu0 0.0
      %2293 = vmatpush1.msra.mxu0 0.0
      %2294 = vmatprep.subr.mxu0 0.0
      %2295 = vmatpush1.msra.mxu0 0.0
      %2296 = vmatprep.subr.mxu0 0.0
      %2297 = vmatpush1.msra.mxu0 0.0
      %2298 = vmatprep.subr.mxu0 0.0
      %2299 = vmatpush1.msra.mxu0 0.0
      %2300 = vmatprep.subr.mxu0 0.0
      %2301 = vmatpush1.msra.mxu0 0.0
      %2302 = vmatprep.subr.mxu0 0.0
      %2303 = vmatpush1.msra.mxu0 0.0
      %2304 = vmatprep.subr.mxu0 0.0
      %2305 = vmatpush1.msra.mxu0 0.0
      %2306 = vmatprep.subr.mxu0 0.0
      %2307 = vmatpush1.msra.mxu0 0.0
      %2308 = vmatprep.subr.mxu0 0.0
      %2309 = vmatpush1.msra.mxu0 0.0
      %2310 = vmatprep.subr.mxu0 0.0
      %2311 = vmatpush1.msra.mxu0 0.0
      %2312 = vmatprep.mubr.f32.mxu0 0.0
      %2313 = vmatmul.mubr.f32.gmra.mrb[0].mxu0 %v2237
      %v2314 = vpop.f32.mrb[0].mxu0
      %v2315 = vadd.f32 0.0, %v2314
      %v2316 = vpop.f32.mrb[0].mxu0
      %v2317 = vadd.f32 0.0, %v2316
      %2318 = vmatprep.mubr.f32.mxu0 0.0
      %2319 = vmatmul.mubr.f32.gmra.mrb[0].mxu0 %v2240
      %v2320 = vpop.f32.mrb[0].mxu0
      %v2321 = vadd.f32 0.0, %v2320
      %v2322 = vpop.f32.mrb[0].mxu0
      %v2323 = vadd.f32 0.0, %v2322
      %2324 = vmatprep.mubr.f32.mxu0 0.0
      %2325 = vmatmul.mubr.f32.gmra.mrb[0].mxu0 %v2243
      %v2326 = vpop.f32.mrb[0].mxu0
      %v2327 = vadd.f32 0.0, %v2326
      %v2328 = vpop.f32.mrb[0].mxu0
      %v2329 = vadd.f32 0.0, %v2328
      %2330 = vmatprep.mubr.f32.mxu0 0.0
      %2331 = vmatmul.mubr.f32.gmra.mrb[0].mxu0 %v2246
      %v2332 = vpop.f32.mrb[0].mxu0
      %v2333 = vadd.f32 0.0, %v2332
      %v2334 = vpop.f32.mrb[0].mxu0
      %v2335 = vadd.f32 0.0, %v2334
      %2336 = vdwg.mxu0
      %v2337 = vadd.f32 %v2191, %v2315
      %v2338 = vadd.f32 %v2192, %v2317
      %v2339 = vadd.f32 %v2193, %v2321
      %v2340 = vadd.f32 %v2194, %v2323
      %v2341 = vadd.f32 %v2195, %v2327
      %v2342 = vadd.f32 %v2196, %v2329
      %v2343 = vadd.f32 %v2197, %v2333
      %v2344 = vadd.f32 %v2198, %v2335
      %2345 = vrot.lane.b32.xlu0 %v1363, 112
      %v2346 = vpop.permute.xlu0 %2345
      %2347 = vrot.lane.b32.xlu0 %v1365, 112
      %v2348 = vpop.permute.xlu0 %2347
      %2349 = vrot.lane.b32.xlu0 %v1367, 112
      %v2350 = vpop.permute.xlu0 %2349
      %2351 = vrot.lane.b32.xlu0 %v1369, 112
      %v2352 = vpop.permute.xlu0 %2351
      %2353 = vrot.lane.b32.xlu0 %v1364, 112
      %v2354 = vpop.permute.xlu0 %2353
      %2355 = vrot.lane.b32.xlu0 %v1366, 112
      %v2356 = vpop.permute.xlu0 %2355
      %2357 = vrot.lane.b32.xlu0 %v1368, 112
      %v2358 = vpop.permute.xlu0 %2357
      %2359 = vrot.lane.b32.xlu0 %v1370, 112
      %v2360 = vpop.permute.xlu0 %2359
      %v2361 = vsel %vm1101, %v2346, %v2354
      %v2362 = vsel %vm1101, %v2348, %v2356
      %v2363 = vsel %vm1101, %v2350, %v2358
      %v2364 = vsel %vm1101, %v2352, %v2360
      %v2365 = vsel %vm1101, %v2354, %v2346
      %v2366 = vsel %vm1101, %v2356, %v2348
      %v2367 = vsel %vm1101, %v2358, %v2350
      %v2368 = vsel %vm1101, %v2360, %v2352
      %v2369 = vsel %vm1106, %v2361, 0.0
      %v2370 = vsel %vm1107, %v2365, 0.0
      %v2371 = vsel %vm1106, %v2362, 0.0
      %v2372 = vsel %vm1107, %v2366, 0.0
      %v2373 = vsel %vm1106, %v2363, 0.0
      %v2374 = vsel %vm1107, %v2367, 0.0
      %v2375 = vsel %vm1106, %v2364, 0.0
      %v2376 = vsel %vm1107, %v2368, 0.0
      %s2377 = scalar_lea.vmem %s2, 224
      %v2378 = vld [vmem:[%s2377] sm:$0xff]
      %v2379 = vld [vmem:[%s2377 + $0x8] sm:$0xff]
      %v2380 = vld [vmem:[%s2377 + $0x10] sm:$0xff]
      %v2381 = vld [vmem:[%s2377 + $0x18] sm:$0xff]
      %v2383 = vsel %vm1444, %v2378, 0
      %v2386 = vsel %vm1444, %v2379, 0
      %v2389 = vsel %vm1444, %v2380, 0
      %v2392 = vsel %vm1444, %v2381, 0
      %2394 = vmatprep.subr.mxu0 %v2370
      %2395 = vmatpush1.msra.mxu0 %v2369
      %2396 = vmatprep.subr.mxu0 %v2372
      %2397 = vmatpush1.msra.mxu0 %v2371
      %2398 = vmatprep.subr.mxu0 %v2374
      %2399 = vmatpush1.msra.mxu0 %v2373
      %2400 = vmatprep.subr.mxu0 %v2376
      %2401 = vmatpush1.msra.mxu0 %v2375
      %2402 = vmatprep.subr.mxu0 0.0
      %2403 = vmatpush1.msra.mxu0 0.0
      %2404 = vmatprep.subr.mxu0 0.0
      %2405 = vmatpush1.msra.mxu0 0.0
      %2406 = vmatprep.subr.mxu0 0.0
      %2407 = vmatpush1.msra.mxu0 0.0
      %2408 = vmatprep.subr.mxu0 0.0
      %2409 = vmatpush1.msra.mxu0 0.0
      %2410 = vmatprep.subr.mxu0 0.0
      %2411 = vmatpush1.msra.mxu0 0.0
      %2412 = vmatprep.subr.mxu0 0.0
      %2413 = vmatpush1.msra.mxu0 0.0
      %2414 = vmatprep.subr.mxu0 0.0
      %2415 = vmatpush1.msra.mxu0 0.0
      %2416 = vmatprep.subr.mxu0 0.0
      %2417 = vmatpush1.msra.mxu0 0.0
      %2418 = vmatprep.subr.mxu0 0.0
      %2419 = vmatpush1.msra.mxu0 0.0
      %2420 = vmatprep.subr.mxu0 0.0
      %2421 = vmatpush1.msra.mxu0 0.0
      %2422 = vmatprep.subr.mxu0 0.0
      %2423 = vmatpush1.msra.mxu0 0.0
      %2424 = vmatprep.subr.mxu0 0.0
      %2425 = vmatpush1.msra.mxu0 0.0
      %2426 = vmatprep.subr.mxu0 0.0
      %2427 = vmatpush1.msra.mxu0 0.0
      %2428 = vmatprep.subr.mxu0 0.0
      %2429 = vmatpush1.msra.mxu0 0.0
      %2430 = vmatprep.subr.mxu0 0.0
      %2431 = vmatpush1.msra.mxu0 0.0
      %2432 = vmatprep.subr.mxu0 0.0
      %2433 = vmatpush1.msra.mxu0 0.0
      %2434 = vmatprep.subr.mxu0 0.0
      %2435 = vmatpush1.msra.mxu0 0.0
      %2436 = vmatprep.subr.mxu0 0.0
      %2437 = vmatpush1.msra.mxu0 0.0
      %2438 = vmatprep.subr.mxu0 0.0
      %2439 = vmatpush1.msra.mxu0 0.0
      %2440 = vmatprep.subr.mxu0 0.0
      %2441 = vmatpush1.msra.mxu0 0.0
      %2442 = vmatprep.subr.mxu0 0.0
      %2443 = vmatpush1.msra.mxu0 0.0
      %2444 = vmatprep.subr.mxu0 0.0
      %2445 = vmatpush1.msra.mxu0 0.0
      %2446 = vmatprep.subr.mxu0 0.0
      %2447 = vmatpush1.msra.mxu0 0.0
      %2448 = vmatprep.subr.mxu0 0.0
      %2449 = vmatpush1.msra.mxu0 0.0
      %2450 = vmatprep.subr.mxu0 0.0
      %2451 = vmatpush1.msra.mxu0 0.0
      %2452 = vmatprep.subr.mxu0 0.0
      %2453 = vmatpush1.msra.mxu0 0.0
      %2454 = vmatprep.subr.mxu0 0.0
      %2455 = vmatpush1.msra.mxu0 0.0
      %2456 = vmatprep.subr.mxu0 0.0
      %2457 = vmatpush1.msra.mxu0 0.0
      %2458 = vmatprep.mubr.f32.mxu0 0.0
      %2459 = vmatmul.mubr.f32.gmra.mrb[0].mxu0 %v2383
      %v2460 = vpop.f32.mrb[0].mxu0
      %v2461 = vadd.f32 0.0, %v2460
      %v2462 = vpop.f32.mrb[0].mxu0
      %v2463 = vadd.f32 0.0, %v2462
      %2464 = vmatprep.mubr.f32.mxu0 0.0
      %2465 = vmatmul.mubr.f32.gmra.mrb[0].mxu0 %v2386
      %v2466 = vpop.f32.mrb[0].mxu0
      %v2467 = vadd.f32 0.0, %v2466
      %v2468 = vpop.f32.mrb[0].mxu0
      %v2469 = vadd.f32 0.0, %v2468
      %2470 = vmatprep.mubr.f32.mxu0 0.0
      %2471 = vmatmul.mubr.f32.gmra.mrb[0].mxu0 %v2389
      %v2472 = vpop.f32.mrb[0].mxu0
      %v2473 = vadd.f32 0.0, %v2472
      %v2474 = vpop.f32.mrb[0].mxu0
      %v2475 = vadd.f32 0.0, %v2474
      %2476 = vmatprep.mubr.f32.mxu0 0.0
      %2477 = vmatmul.mubr.f32.gmra.mrb[0].mxu0 %v2392
      %v2478 = vpop.f32.mrb[0].mxu0
      %v2479 = vadd.f32 0.0, %v2478
      %v2480 = vpop.f32.mrb[0].mxu0
      %v2481 = vadd.f32 0.0, %v2480
      %2482 = vdwg.mxu0
      %v2483 = vadd.f32 %v2337, %v2461
      %v2484 = vadd.f32 %v2338, %v2463
      %v2485 = vadd.f32 %v2339, %v2467
      %v2486 = vadd.f32 %v2340, %v2469
      %v2487 = vadd.f32 %v2341, %v2473
      %v2488 = vadd.f32 %v2342, %v2475
      %v2489 = vadd.f32 %v2343, %v2479
      %v2490 = vadd.f32 %v2344, %v2481
      %2491 = vrot.lane.b32.xlu0 %v1363, 111
      %v2492 = vpop.permute.xlu0 %2491
      %2493 = vrot.lane.b32.xlu0 %v1365, 111
      %v2494 = vpop.permute.xlu0 %2493
      %2495 = vrot.lane.b32.xlu0 %v1367, 111
      %v2496 = vpop.permute.xlu0 %2495
      %2497 = vrot.lane.b32.xlu0 %v1369, 111
      %v2498 = vpop.permute.xlu0 %2497
      %2499 = vrot.lane.b32.xlu0 %v1364, 111
      %v2500 = vpop.permute.xlu0 %2499
      %2501 = vrot.lane.b32.xlu0 %v1366, 111
      %v2502 = vpop.permute.xlu0 %2501
      %2503 = vrot.lane.b32.xlu0 %v1368, 111
      %v2504 = vpop.permute.xlu0 %2503
      %2505 = vrot.lane.b32.xlu0 %v1370, 111
      %v2506 = vpop.permute.xlu0 %2505
      %v2507 = vsel %vm1234, %v2492, %v2500
      %v2508 = vsel %vm1234, %v2494, %v2502
      %v2509 = vsel %vm1234, %v2496, %v2504
      %v2510 = vsel %vm1234, %v2498, %v2506
      %v2511 = vsel %vm1234, %v2500, %v2492
      %v2512 = vsel %vm1234, %v2502, %v2494
      %v2513 = vsel %vm1234, %v2504, %v2496
      %v2514 = vsel %vm1234, %v2506, %v2498
      %v2515 = vsel %vm1239, %v2507, 0.0
      %v2516 = vsel %vm1240, %v2511, 0.0
      %v2517 = vsel %vm1239, %v2508, 0.0
      %v2518 = vsel %vm1240, %v2512, 0.0
      %v2519 = vsel %vm1239, %v2509, 0.0
      %v2520 = vsel %vm1240, %v2513, 0.0
      %v2521 = vsel %vm1239, %v2510, 0.0
      %v2522 = vsel %vm1240, %v2514, 0.0
      %s2523 = scalar_lea.vmem %s2, 256
      %v2524 = vld [vmem:[%s2523] sm:$0xff]
      %v2525 = vld [vmem:[%s2523 + $0x8] sm:$0xff]
      %v2526 = vld [vmem:[%s2523 + $0x10] sm:$0xff]
      %v2527 = vld [vmem:[%s2523 + $0x18] sm:$0xff]
      %v2529 = vsel %vm1444, %v2524, 0
      %v2532 = vsel %vm1444, %v2525, 0
      %v2535 = vsel %vm1444, %v2526, 0
      %v2538 = vsel %vm1444, %v2527, 0
      %2540 = vmatprep.subr.mxu0 %v2516
      %2541 = vmatpush1.msra.mxu0 %v2515
      %2542 = vmatprep.subr.mxu0 %v2518
      %2543 = vmatpush1.msra.mxu0 %v2517
      %2544 = vmatprep.subr.mxu0 %v2520
      %2545 = vmatpush1.msra.mxu0 %v2519
      %2546 = vmatprep.subr.mxu0 %v2522
      %2547 = vmatpush1.msra.mxu0 %v2521
      %2548 = vmatprep.subr.mxu0 0.0
      %2549 = vmatpush1.msra.mxu0 0.0
      %2550 = vmatprep.subr.mxu0 0.0
      %2551 = vmatpush1.msra.mxu0 0.0
      %2552 = vmatprep.subr.mxu0 0.0
      %2553 = vmatpush1.msra.mxu0 0.0
      %2554 = vmatprep.subr.mxu0 0.0
      %2555 = vmatpush1.msra.mxu0 0.0
      %2556 = vmatprep.subr.mxu0 0.0
      %2557 = vmatpush1.msra.mxu0 0.0
      %2558 = vmatprep.subr.mxu0 0.0
      %2559 = vmatpush1.msra.mxu0 0.0
      %2560 = vmatprep.subr.mxu0 0.0
      %2561 = vmatpush1.msra.mxu0 0.0
      %2562 = vmatprep.subr.mxu0 0.0
      %2563 = vmatpush1.msra.mxu0 0.0
      %2564 = vmatprep.subr.mxu0 0.0
      %2565 = vmatpush1.msra.mxu0 0.0
      %2566 = vmatprep.subr.mxu0 0.0
      %2567 = vmatpush1.msra.mxu0 0.0
      %2568 = vmatprep.subr.mxu0 0.0
      %2569 = vmatpush1.msra.mxu0 0.0
      %2570 = vmatprep.subr.mxu0 0.0
      %2571 = vmatpush1.msra.mxu0 0.0
      %2572 = vmatprep.subr.mxu0 0.0
      %2573 = vmatpush1.msra.mxu0 0.0
      %2574 = vmatprep.subr.mxu0 0.0
      %2575 = vmatpush1.msra.mxu0 0.0
      %2576 = vmatprep.subr.mxu0 0.0
      %2577 = vmatpush1.msra.mxu0 0.0
      %2578 = vmatprep.subr.mxu0 0.0
      %2579 = vmatpush1.msra.mxu0 0.0
      %2580 = vmatprep.subr.mxu0 0.0
      %2581 = vmatpush1.msra.mxu0 0.0
      %2582 = vmatprep.subr.mxu0 0.0
      %2583 = vmatpush1.msra.mxu0 0.0
      %2584 = vmatprep.subr.mxu0 0.0
      %2585 = vmatpush1.msra.mxu0 0.0
      %2586 = vmatprep.subr.mxu0 0.0
      %2587 = vmatpush1.msra.mxu0 0.0
      %2588 = vmatprep.subr.mxu0 0.0
      %2589 = vmatpush1.msra.mxu0 0.0
      %2590 = vmatprep.subr.mxu0 0.0
      %2591 = vmatpush1.msra.mxu0 0.0
      %2592 = vmatprep.subr.mxu0 0.0
      %2593 = vmatpush1.msra.mxu0 0.0
      %2594 = vmatprep.subr.mxu0 0.0
      %2595 = vmatpush1.msra.mxu0 0.0
      %2596 = vmatprep.subr.mxu0 0.0
      %2597 = vmatpush1.msra.mxu0 0.0
      %2598 = vmatprep.subr.mxu0 0.0
      %2599 = vmatpush1.msra.mxu0 0.0
      %2600 = vmatprep.subr.mxu0 0.0
      %2601 = vmatpush1.msra.mxu0 0.0
      %2602 = vmatprep.subr.mxu0 0.0
      %2603 = vmatpush1.msra.mxu0 0.0
      %2604 = vmatprep.mubr.f32.mxu0 0.0
      %2605 = vmatmul.mubr.f32.gmra.mrb[0].mxu0 %v2529
      %v2606 = vpop.f32.mrb[0].mxu0
      %v2607 = vadd.f32 0.0, %v2606
      %v2608 = vpop.f32.mrb[0].mxu0
      %v2609 = vadd.f32 0.0, %v2608
      %2610 = vmatprep.mubr.f32.mxu0 0.0
      %2611 = vmatmul.mubr.f32.gmra.mrb[0].mxu0 %v2532
      %v2612 = vpop.f32.mrb[0].mxu0
      %v2613 = vadd.f32 0.0, %v2612
      %v2614 = vpop.f32.mrb[0].mxu0
      %v2615 = vadd.f32 0.0, %v2614
      %2616 = vmatprep.mubr.f32.mxu0 0.0
      %2617 = vmatmul.mubr.f32.gmra.mrb[0].mxu0 %v2535
      %v2618 = vpop.f32.mrb[0].mxu0
      %v2619 = vadd.f32 0.0, %v2618
      %v2620 = vpop.f32.mrb[0].mxu0
      %v2621 = vadd.f32 0.0, %v2620
      %2622 = vmatprep.mubr.f32.mxu0 0.0
      %2623 = vmatmul.mubr.f32.gmra.mrb[0].mxu0 %v2538
      %v2624 = vpop.f32.mrb[0].mxu0
      %v2625 = vadd.f32 0.0, %v2624
      %v2626 = vpop.f32.mrb[0].mxu0
      %v2627 = vadd.f32 0.0, %v2626
      %2628 = vdwg.mxu0
      %v2629 = vadd.f32 %v2483, %v2607
      %v2630 = vadd.f32 %v2484, %v2609
      %v2631 = vadd.f32 %v2485, %v2613
      %v2632 = vadd.f32 %v2486, %v2615
      %v2633 = vadd.f32 %v2487, %v2619
      %v2634 = vadd.f32 %v2488, %v2621
      %v2635 = vadd.f32 %v2489, %v2625
      %v2636 = vadd.f32 %v2490, %v2627
      %v2637 = vmax.f32 %v2629, 0.0
      %v2638 = vmax.f32 %v2630, 0.0
      %v2639 = vmax.f32 %v2631, 0.0
      %v2640 = vmax.f32 %v2632, 0.0
      %v2641 = vmax.f32 %v2633, 0.0
      %v2642 = vmax.f32 %v2634, 0.0
      %v2643 = vmax.f32 %v2635, 0.0
      %v2644 = vmax.f32 %v2636, 0.0
      %2645 = vxpose.xlu0.b32.start [1/16] %v2637, 128
      %2646 = vxpose.xlu0.b32.cont [2/16] %v2639, 128
      %2647 = vxpose.xlu0.b32.cont [3/16] %v2641, 128
      %2648 = vxpose.xlu0.b32.cont [4/16] %v2643, 128
      %2649 = vxpose.xlu0.b32.cont [5/16] 0.0, 128
      %2650 = vxpose.xlu0.b32.cont [6/16] 0.0, 128
      %2651 = vxpose.xlu0.b32.cont [7/16] 0.0, 128
      %2652 = vxpose.xlu0.b32.cont [8/16] 0.0, 128
      %2653 = vxpose.xlu0.b32.cont [9/16] 0.0, 128
      %2654 = vxpose.xlu0.b32.cont [10/16] 0.0, 128
      %2655 = vxpose.xlu0.b32.cont [11/16] 0.0, 128
      %2656 = vxpose.xlu0.b32.cont [12/16] 0.0, 128
      %2657 = vxpose.xlu0.b32.cont [13/16] 0.0, 128
      %2658 = vxpose.xlu0.b32.cont [14/16] 0.0, 128
      %2659 = vxpose.xlu0.b32.cont [15/16] 0.0, 128
      %2660 = vxpose.xlu0.b32.end [16/16] 0.0, 128
      %v2661 = vpop.trf.xlu0
      %v2662 = vpop.trf.xlu0
      %v2663 = vpop.trf.xlu0
      %v2664 = vpop.trf.xlu0
      %v2665 = vpop.trf.xlu0
      %v2666 = vpop.trf.xlu0
      %v2667 = vpop.trf.xlu0
      %v2668 = vpop.trf.xlu0
      %v2669 = vpop.trf.xlu0
      %v2670 = vpop.trf.xlu0
      %v2671 = vpop.trf.xlu0
      %v2672 = vpop.trf.xlu0
      %v2673 = vpop.trf.xlu0
      %v2674 = vpop.trf.xlu0
      %v2675 = vpop.trf.xlu0
      %v2676 = vpop.trf.xlu0
      %2677 = vxpose.xlu0.b32.start [1/16] %v2638, 128
      %2678 = vxpose.xlu0.b32.cont [2/16] %v2640, 128
      %2679 = vxpose.xlu0.b32.cont [3/16] %v2642, 128
      %2680 = vxpose.xlu0.b32.cont [4/16] %v2644, 128
      %2681 = vxpose.xlu0.b32.cont [5/16] 0.0, 128
      %2682 = vxpose.xlu0.b32.cont [6/16] 0.0, 128
      %2683 = vxpose.xlu0.b32.cont [7/16] 0.0, 128
      %2684 = vxpose.xlu0.b32.cont [8/16] 0.0, 128
      %2685 = vxpose.xlu0.b32.cont [9/16] 0.0, 128
      %2686 = vxpose.xlu0.b32.cont [10/16] 0.0, 128
      %2687 = vxpose.xlu0.b32.cont [11/16] 0.0, 128
      %2688 = vxpose.xlu0.b32.cont [12/16] 0.0, 128
      %2689 = vxpose.xlu0.b32.cont [13/16] 0.0, 128
      %2690 = vxpose.xlu0.b32.cont [14/16] 0.0, 128
      %2691 = vxpose.xlu0.b32.cont [15/16] 0.0, 128
      %2692 = vxpose.xlu0.b32.end [16/16] 0.0, 128
      %v2693 = vpop.trf.xlu0
      %v2694 = vpop.trf.xlu0
      %v2695 = vpop.trf.xlu0
      %v2696 = vpop.trf.xlu0
      %v2697 = vpop.trf.xlu0
      %v2698 = vpop.trf.xlu0
      %v2699 = vpop.trf.xlu0
      %v2700 = vpop.trf.xlu0
      %v2701 = vpop.trf.xlu0
      %v2702 = vpop.trf.xlu0
      %v2703 = vpop.trf.xlu0
      %v2704 = vpop.trf.xlu0
      %v2705 = vpop.trf.xlu0
      %v2706 = vpop.trf.xlu0
      %v2707 = vpop.trf.xlu0
      %v2708 = vpop.trf.xlu0
      %2709 = vst.msk [vmem:[%s170] sm:$0xff] %vm1444, %v2661
      %2710 = vst.msk [vmem:[%s170 + $0x8] sm:$0xff] %vm1444, %v2662
      %2711 = vst.msk [vmem:[%s170 + $0x10] sm:$0xff] %vm1444, %v2663
      %2712 = vst.msk [vmem:[%s170 + $0x18] sm:$0xff] %vm1444, %v2664
      %2713 = vst.msk [vmem:[%s170 + $0x20] sm:$0xff] %vm1444, %v2665
      %2714 = vst.msk [vmem:[%s170 + $0x28] sm:$0xff] %vm1444, %v2666
      %2715 = vst.msk [vmem:[%s170 + $0x30] sm:$0xff] %vm1444, %v2667
      %2716 = vst.msk [vmem:[%s170 + $0x38] sm:$0xff] %vm1444, %v2668
      %2717 = vst.msk [vmem:[%s170 + $0x40] sm:$0xff] %vm1444, %v2669
      %2718 = vst.msk [vmem:[%s170 + $0x48] sm:$0xff] %vm1444, %v2670
      %2719 = vst.msk [vmem:[%s170 + $0x50] sm:$0xff] %vm1444, %v2671
      %2720 = vst.msk [vmem:[%s170 + $0x58] sm:$0xff] %vm1444, %v2672
      %2721 = vst.msk [vmem:[%s170 + $0x60] sm:$0xff] %vm1444, %v2673
      %2722 = vst.msk [vmem:[%s170 + $0x68] sm:$0xff] %vm1444, %v2674
      %2723 = vst.msk [vmem:[%s170 + $0x70] sm:$0xff] %vm1444, %v2675
      %2724 = vst.msk [vmem:[%s170 + $0x78] sm:$0xff] %vm1444, %v2676
      %2725 = vst.msk [vmem:[%s170 + $0x80] sm:$0xff] %vm1444, %v2693
      %2726 = vst.msk [vmem:[%s170 + $0x88] sm:$0xff] %vm1444, %v2694
      %2727 = vst.msk [vmem:[%s170 + $0x90] sm:$0xff] %vm1444, %v2695
      %2728 = vst.msk [vmem:[%s170 + $0x98] sm:$0xff] %vm1444, %v2696
      %2729 = vst.msk [vmem:[%s170 + $0xa0] sm:$0xff] %vm1444, %v2697
      %2730 = vst.msk [vmem:[%s170 + $0xa8] sm:$0xff] %vm1444, %v2698
      %2731 = vst.msk [vmem:[%s170 + $0xb0] sm:$0xff] %vm1444, %v2699
      %2732 = vst.msk [vmem:[%s170 + $0xb8] sm:$0xff] %vm1444, %v2700
      %2733 = vst.msk [vmem:[%s170 + $0xc0] sm:$0xff] %vm1444, %v2701
      %2734 = vst.msk [vmem:[%s170 + $0xc8] sm:$0xff] %vm1444, %v2702
      %2735 = vst.msk [vmem:[%s170 + $0xd0] sm:$0xff] %vm1444, %v2703
      %2736 = vst.msk [vmem:[%s170 + $0xd8] sm:$0xff] %vm1444, %v2704
      %2737 = vst.msk [vmem:[%s170 + $0xe0] sm:$0xff] %vm1444, %v2705
      %2738 = vst.msk [vmem:[%s170 + $0xe8] sm:$0xff] %vm1444, %v2706
      %2739 = vst.msk [vmem:[%s170 + $0xf0] sm:$0xff] %vm1444, %v2707
      %2740 = vst.msk [vmem:[%s170 + $0xf8] sm:$0xff] %vm1444, %v2708
      %p2741 = scmp.lt.s32.totalorder %s14, 1
      %s2742 = scalar_select %p2741, %s14, 1
      %s2743 = smul.addr %s2742, 32
      %s2744 = smul.addr %s2743, 8
      %s2745 = scalar_lea.vmem %s3, %s2744
      // Predicated region
      $region33: #{conv_module_forward.1} parent=31 // pred_check
        %p2746 = pneg %p100
      $region34: #{conv_module_forward.1} parent=31 // pred_check_branch
        %2748 = sbr.rel (%p2746) target = $region36
      $region35: #{conv_module_forward.1} parent=31 // pred_region
        _
      $region36: #{conv_module_forward.1} parent=31 // pred_fallthru
        _
    $region32: #{conv_module_forward.1} parent=5 // pred_fallthru
      _
    %p2749 = scmp.le.s32.totalorder 2, %s9
    // Predicated region
    $region37: #{conv_module_forward.1} parent=5 // pred_check
      %p2750 = pneg %p2749
    $region38: #{conv_module_forward.1} parent=5 // pred_check_branch
      %2752 = sbr.rel (%p2750) target = $region40
    $region39: #{conv_module_forward.1} parent=5 // pred_region
      %s2753 = ssub.s32 %s9, 2
      // Predicated region
      $region41: #{conv_module_forward.1} parent=39 // pred_check
        %p2754 = pneg %p106
      $region42: #{conv_module_forward.1} parent=39 // pred_check_branch
        %2756 = sbr.rel (%p2754) target = $region44
      $region43: #{conv_module_forward.1} parent=39 // pred_region
        %p2757 = scmp.lt.s32.totalorder %s15, 1
        %s2758 = scalar_select %p2757, %s15, 1
        %s2759 = smul.addr %s2758, 32
        %s2760 = smul.addr %s2759, 8
        %s2761 = scalar_lea.vmem %s3, %s2760
      $region44: #{conv_module_forward.1} parent=39 // pred_fallthru
        _
    $region40: #{conv_module_forward.1} parent=5 // pred_fallthru
      _
  $region6: #{conv_module_forward.1} parent=0 // loop_footer
    %s13 = sadd.s32 1, %s9
  $region7: #{conv_module_forward.1} parent=0 // loop_footer_branch
    %8 = sbr.rel target = $region3
  $region8: #{conv_module_forward.1} parent=0 // loop_exit
    _

</llo_original>
